<compile_context>
chip_gen: v6e
topology: v6e:2x2x1
jax: 0.10.0
libtpu: 0.0.40
codegen_flags: <defaults>
</compile_context>

<pallas_src>
import jax
import jax.numpy as jnp
from jax.experimental import pallas as pl
from jax.experimental.pallas import tpu as pltpu


_LANE = 128      # TPU lane width (last-dim vreg axis)
_SUBLANE = 8     # sublane count (second-to-last dim multiple for f32 blocks)


def _round_up(x, m):
    return ((x + m - 1) // m) * m


def _choose_row_tile(n_rows, *, tm_min=512, tm_max=2048, target_steps=8):
    """Row tile in [512, 2048], preferring ~target_steps grid steps so the
    output writeback of step i-1 overlaps the fetch/compute of step i
    (>= 3-4 steps per TensorCore after v7x's 2-way parallel split).  512-row
    tiles already sit near the HBM roofline (~85% measured) at ~0.35us/step
    pipeline overhead."""
    tm = _round_up(pl.cdiv(n_rows, target_steps), _SUBLANE)
    tm = max(tm_min, min(tm_max, tm))
    return min(tm, _round_up(n_rows, _SUBLANE))


def _vmem_tile_bytes(shape, dtype):
    """VMEM footprint of ONE buffer of `shape`: last dim padded to 128 lanes,
    second-to-last to the packed sublane count (a (tm, 14) bf16 tile really
    occupies tm x 128 lanes in VMEM, ~9x its raw size)."""
    itemsize = jnp.dtype(dtype).itemsize
    sublane = _SUBLANE * max(1, 4 // itemsize)
    if len(shape) == 1:
        rows, cols = 1, int(shape[0])
    else:
        rows, cols = int(shape[-2]), int(shape[-1])
    lead = 1
    for s in shape[:-2]:
        lead *= int(s)
    return lead * _round_up(rows, sublane) * _round_up(cols, _LANE) * itemsize


def _vmem_limit(vmem_need):
    # 2x headroom, floored at 16 MiB, capped at 32 MiB (half of v7x's 64 MiB
    # per-TensorCore VMEM; v5e/v6e have 128 MiB so this is safe everywhere).
    return int(min(max(2 * vmem_need, 16 << 20), 32 << 20))


# --------------------------------------------------------------------------- #
# Fused (multi-slice) Linear:  y = sum_i xs[i] @ ws[i] + b
# Implements nn.Linear over a torch.cat([...], dim=1) of row-aligned feature
# slices without ever materializing the concatenation.
# --------------------------------------------------------------------------- #
def _make_fused_linear_kernel(n_slices):
    def kernel(*refs):
        x_refs = refs[:n_slices]
        w_refs = refs[n_slices:2 * n_slices]
        b_ref = refs[2 * n_slices]
        o_ref = refs[2 * n_slices + 1]
        acc = jnp.dot(x_refs[0][...], w_refs[0][...],
                      preferred_element_type=jnp.float32)
        for x_ref, w_ref in zip(x_refs[1:], w_refs[1:]):
            acc = acc + jnp.dot(x_ref[...], w_ref[...],
                                preferred_element_type=jnp.float32)
        # bias stays f32 and is added in-kernel (free VPU add under the DMA)
        o_ref[...] = (acc + b_ref[...]).astype(o_ref.dtype)
    return kernel


def fused_linear_forward(xs, ws, b, *, out_dtype=jnp.float32,
                         input_dtype=jnp.bfloat16, tm=None,
                         xla_fallback_rows=2048):
    """xs[i]: (N, d_i); ws[i]: (d_i, E) (= W.T slice); b: (E,).  Returns (N, E)."""
    xs, ws = tuple(xs), tuple(ws)
    assert len(xs) == len(ws) >= 1
    n = xs[0].shape[0]
    e = ws[0].shape[1]
    for x, w in zip(xs, ws):
        assert x.ndim == 2 and x.shape[0] == n and w.shape == (x.shape[1], e)

    xs = tuple(x.astype(input_dtype) for x in xs)
    ws = tuple(w.astype(input_dtype) for w in ws)
    b2d = jnp.asarray(b, jnp.float32).reshape(1, e)

    if n < xla_fallback_rows:
        # Tiny row counts: custom-call launch + pipeline prologue dominates,
        # and XLA can fuse the small matmul with neighbouring ops.
        acc = sum(jnp.dot(x, w, preferred_element_type=jnp.float32)
                  for x, w in zip(xs, ws))
        return (acc + b2d).astype(out_dtype)

    if tm is None:
        tm = _choose_row_tile(n)
    tm = min(_round_up(int(tm), _SUBLANE), _round_up(n, _SUBLANE))
    grid = (pl.cdiv(n, tm),)   # ragged tail handled by Pallas block padding

    in_specs = []
    for x in xs:
        in_specs.append(pl.BlockSpec((tm, x.shape[1]), lambda i: (i, 0)))
    for w in ws:
        in_specs.append(pl.BlockSpec(w.shape, lambda i: (0, 0)))   # resident
    in_specs.append(pl.BlockSpec((1, e), lambda i: (0, 0)))        # bias, f32

    vmem_need = sum(2 * _vmem_tile_bytes((tm, x.shape[1]), input_dtype)
                    for x in xs)
    vmem_need += sum(2 * _vmem_tile_bytes(w.shape, input_dtype) for w in ws)
    vmem_need += 2 * _vmem_tile_bytes((1, e), jnp.float32)
    vmem_need += 2 * _vmem_tile_bytes((tm, e), out_dtype)

    d_total = sum(int(x.shape[1]) for x in xs)
    bytes_accessed = (sum(x.size * x.dtype.itemsize for x in xs)
                      + sum(w.size * w.dtype.itemsize for w in ws)
                      + b2d.size * b2d.dtype.itemsize
                      + n * e * jnp.dtype(out_dtype).itemsize)
    cost = pl.CostEstimate(flops=2 * n * d_total * e, transcendentals=0,
                           bytes_accessed=int(bytes_accessed))

    return pl.pallas_call(
        _make_fused_linear_kernel(len(xs)),
        out_shape=jax.ShapeDtypeStruct((n, e), out_dtype),
        grid_spec=pltpu.PrefetchScalarGridSpec(
            num_scalar_prefetch=0,
            grid=grid,
            in_specs=in_specs,
            out_specs=pl.BlockSpec((tm, e), lambda i: (i, 0)),
        ),
        compiler_params=pltpu.CompilerParams(
            dimension_semantics=("parallel",),
            vmem_limit_bytes=_vmem_limit(vmem_need),
        ),
        cost_estimate=cost,
    )(*xs, *ws, b2d)


# --------------------------------------------------------------------------- #
# Fused 2-layer MLP head:  Linear(D->H) -> ReLU -> [Dropout = id] -> Linear(H->O)
# (EGNN.cls_layer).  The (tm, H) intermediate stays in VMEM/vregs.
# --------------------------------------------------------------------------- #
def _fused_mlp_kernel(x_ref, w1_ref, b1_ref, w2_ref, b2_ref, o_ref):
    h = jnp.dot(x_ref[...], w1_ref[...], preferred_element_type=jnp.float32)
    h = jnp.maximum(h + b1_ref[...], 0.0)
    o = jnp.dot(h.astype(w2_ref.dtype), w2_ref[...],
                preferred_element_type=jnp.float32)
    o_ref[...] = (o + b2_ref[...]).astype(o_ref.dtype)


def fused_mlp_forward(x, w1, b1, w2, b2, *, out_dtype=jnp.float32,
                      input_dtype=jnp.bfloat16, tm=None, xla_fallback_rows=2048):
    n, d = x.shape
    h_dim, o_dim = w1.shape[1], w2.shape[1]
    assert w1.shape == (d, h_dim) and w2.shape == (h_dim, o_dim)

    x = x.astype(input_dtype)
    w1 = w1.astype(input_dtype)
    w2 = w2.astype(input_dtype)
    b1 = jnp.asarray(b1, jnp.float32).reshape(1, h_dim)
    b2 = jnp.asarray(b2, jnp.float32).reshape(1, o_dim)

    if n < xla_fallback_rows:
        hid = jnp.maximum(
            jnp.dot(x, w1, preferred_element_type=jnp.float32) + b1, 0.0)
        out = jnp.dot(hid.astype(input_dtype), w2,
                      preferred_element_type=jnp.float32) + b2
        return out.astype(out_dtype)

    if tm is None:
        tm = _choose_row_tile(n)
    tm = min(_round_up(int(tm), _SUBLANE), _round_up(n, _SUBLANE))
    grid = (pl.cdiv(n, tm),)

    vmem_need = (2 * _vmem_tile_bytes((tm, d), input_dtype)
                 + 2 * _vmem_tile_bytes(w1.shape, input_dtype)
                 + 2 * _vmem_tile_bytes(w2.shape, input_dtype)
                 + 2 * _vmem_tile_bytes((1, h_dim), jnp.float32)
                 + 2 * _vmem_tile_bytes((1, o_dim), jnp.float32)
                 + 2 * _vmem_tile_bytes((tm, o_dim), out_dtype)
                 + _vmem_tile_bytes((tm, h_dim), jnp.float32))   # live intermediate

    bytes_accessed = (x.size * x.dtype.itemsize
                      + w1.size * w1.dtype.itemsize + w2.size * w2.dtype.itemsize
                      + b1.size * 4 + b2.size * 4
                      + n * o_dim * jnp.dtype(out_dtype).itemsize)
    cost = pl.CostEstimate(flops=2 * n * (d * h_dim + h_dim * o_dim),
                           transcendentals=0, bytes_accessed=int(bytes_accessed))

    return pl.pallas_call(
        _fused_mlp_kernel,
        out_shape=jax.ShapeDtypeStruct((n, o_dim), out_dtype),
        grid_spec=pltpu.PrefetchScalarGridSpec(
            num_scalar_prefetch=0,
            grid=grid,
            in_specs=[
                pl.BlockSpec((tm, d), lambda i: (i, 0)),
                pl.BlockSpec(w1.shape, lambda i: (0, 0)),
                pl.BlockSpec((1, h_dim), lambda i: (0, 0)),
                pl.BlockSpec(w2.shape, lambda i: (0, 0)),
                pl.BlockSpec((1, o_dim), lambda i: (0, 0)),
            ],
            out_specs=pl.BlockSpec((tm, o_dim), lambda i: (i, 0)),
        ),
        compiler_params=pltpu.CompilerParams(
            dimension_semantics=("parallel",),
            vmem_limit_bytes=_vmem_limit(vmem_need),
        ),
        cost_estimate=cost,
    )(x, w1, b1, w2, b2)


# --------------------------------------------------------------------------- #
# Synthetic parameters + pure-JAX references
# --------------------------------------------------------------------------- #
def init_fused_linear_params(key, in_dims, out_dim):
    """torch-style nn.Linear(sum(in_dims), out_dim) params split per feature
    slice: ws[i] is (in_dims[i], out_dim) (i.e. W.T slices), b is (out_dim,)."""
    fan_in = sum(in_dims)
    a = (6.0 / (fan_in + out_dim)) ** 0.5
    ws = []
    for d in in_dims:
        key, kw = jax.random.split(key)
        ws.append(jax.random.uniform(kw, (d, out_dim), jnp.float32, -a, a))
    key, kb = jax.random.split(key)
    bound = 1.0 / (fan_in ** 0.5)
    b = jax.random.uniform(kb, (out_dim,), jnp.float32, -bound, bound)
    return key, ws, b


def _bf(a):
    return a.astype(jnp.bfloat16).astype(jnp.float32)


def fused_linear_reference(xs, ws, b):
    """Mirrors torch.cat + nn.Linear on bf16-rounded inputs/weights with f32
    accumulation (matches the kernel's precision pipeline)."""
    acc = sum(jnp.dot(_bf(x), _bf(w), precision=jax.lax.Precision.HIGHEST)
              for x, w in zip(xs, ws))
    return acc + jnp.asarray(b, jnp.float32)


def fused_mlp_reference(x, w1, b1, w2, b2):
    h = jnp.maximum(
        jnp.dot(_bf(x), _bf(w1), precision=jax.lax.Precision.HIGHEST) + b1, 0.0)
    return jnp.dot(_bf(h), _bf(w2), precision=jax.lax.Precision.HIGHEST) + b2


if __name__ == "__main__":
    key = jax.random.PRNGKey(0)

    # Small config consistent with the module (egnn.yaml-style defaults).
    n_nodes = 4000            # nodes across the graph batch (not a tile multiple)
    x_dim, mu_dim = 16, 5     # data.x / data.mu_r_norm feature widths
    node_embedding_dim = 32   # config['node_embedding_dim']
    hidden_channels = 64      # config['hidden_channels']
    num_labels = 10           # config['num_labels']
    lin_out_dim = 20          # EGNN `lin` out_dim (aa_classification head)
    protein_dim = 1024        # gap(protein_data.x) width
    n_graphs = 64             # graphs in the batch (cls-head rows)

    key, kx, kmu, kcls = jax.random.split(key, 4)
    x = jax.random.normal(kx, (n_nodes, x_dim), jnp.float32)
    mu_r_norm = jax.random.normal(kmu, (n_nodes, mu_dim), jnp.float32)

    key, emb_ws, emb_b = init_fused_linear_params(
        key, (x_dim, mu_dim), node_embedding_dim)
    key, lin_ws, lin_b = init_fused_linear_params(
        key, (node_embedding_dim,), lin_out_dim)
    key, cls1_ws, cls1_b = init_fused_linear_params(
        key, (node_embedding_dim + protein_dim,), 2 * hidden_channels)
    key, cls2_ws, cls2_b = init_fused_linear_params(
        key, (2 * hidden_channels,), num_labels)

    # --- node_embedding: Linear(torch.cat([x, mu_r_norm])), bf16 activations --
    emb = fused_linear_forward((x, mu_r_norm), emb_ws, emb_b,
                               out_dtype=jnp.bfloat16)
    emb = jax.block_until_ready(emb)
    assert emb.shape == (n_nodes, node_embedding_dim)
    assert emb.dtype == jnp.bfloat16
    emb_ref = fused_linear_reference((x, mu_r_norm), emb_ws, emb_b)
    assert jnp.allclose(emb.astype(jnp.float32), _bf(emb_ref),
                        atol=2e-2, rtol=2e-2), "node_embedding mismatch"

    # Tiny row counts take the XLA fallback path; check it agrees too.
    emb_small = fused_linear_forward((x[:100], mu_r_norm[:100]), emb_ws, emb_b,
                                     out_dtype=jnp.bfloat16)
    assert jnp.allclose(emb_small.astype(jnp.float32), _bf(emb_ref[:100]),
                        atol=2e-2, rtol=2e-2), "XLA fallback mismatch"

    # TODO(synk): EGNN_Sparse message-passing layers (edge_index gather/scatter,
    #             residual adds) are graph-sparse and not lowered; `lin` below is
    #             demonstrated directly on the embedding output.

    # --- lin head (aa_classification path), f32 logits ------------------------
    emb_f32 = emb.astype(jnp.float32)
    logits = fused_linear_forward((emb_f32,), lin_ws, lin_b,
                                  out_dtype=jnp.float32)
    logits = jax.block_until_ready(logits)
    assert logits.shape == (n_nodes, lin_out_dim) and logits.dtype == jnp.float32
    lin_ref = fused_linear_reference((emb_f32,), lin_ws, lin_b)
    assert jnp.allclose(logits, lin_ref, atol=2e-2, rtol=2e-2), "lin mismatch"

    # --- cls_layer MLP head (multi_label_classification, linear cls type) -----
    # Stand-in for torch.cat([scatter_mean(x, batch), gap(protein)], dim=1).
    # TODO(synk): scatter_mean / global pooling are graph-sparse; not lowered.
    concate_x = jax.random.normal(
        kcls, (n_graphs, node_embedding_dim + protein_dim), jnp.float32)
    # Forced onto the Pallas path (xla_fallback_rows=0) purely to exercise the
    # fused kernel; real graph-batch row counts below the crossover should keep
    # the default and take the XLA fallback.
    cls_out = fused_mlp_forward(concate_x, cls1_ws[0], cls1_b,
                                cls2_ws[0], cls2_b, out_dtype=jnp.float32,
                                xla_fallback_rows=0)
    cls_out = jax.block_until_ready(cls_out)
    assert cls_out.shape == (n_graphs, num_labels)
    cls_ref = fused_mlp_reference(concate_x, cls1_ws[0], cls1_b,
                                  cls2_ws[0], cls2_b)
    assert jnp.allclose(cls_out, cls_ref, atol=3e-2, rtol=3e-2), "cls mismatch"

    print("KERNEL_OK")
</pallas_src>

<mosaic_0001>
module attributes {stable_mosaic.version = 11 : i64} {
  func.func @kernel(%arg0: i32, %arg1: memref<512x16xbf16, #tpu.memory_space<vmem>>, %arg2: memref<512x5xbf16, #tpu.memory_space<vmem>>, %arg3: memref<16x32xbf16, #tpu.memory_space<vmem>>, %arg4: memref<5x32xbf16, #tpu.memory_space<vmem>>, %arg5: memref<1x32xf32, #tpu.memory_space<vmem>>, %arg6: memref<512x32xbf16, #tpu.memory_space<vmem>>) attributes {dimension_semantics = [#tpu.dimension_semantics<parallel>], iteration_bounds = array<i64: 8>, scalar_prefetch = 0 : i64, scratch_operands = 0 : i64, tpu.core_type = #tpu.core_type<tc>, window_params = [{transform_indices = @transform_0, window_bounds = array<i64: 512, 16>}, {transform_indices = @transform_1, window_bounds = array<i64: 512, 5>}, {pipeline_mode = #tpu.pipeline_mode<synchronous>, transform_indices = @transform_2, window_bounds = array<i64: 16, 32>}, {pipeline_mode = #tpu.pipeline_mode<synchronous>, transform_indices = @transform_3, window_bounds = array<i64: 5, 32>}, {pipeline_mode = #tpu.pipeline_mode<synchronous>, transform_indices = @transform_4, window_bounds = array<i64: 1, 32>}, {transform_indices = @transform_5, window_bounds = array<i64: 512, 32>}]} {
    %c0 = arith.constant 0 : index
    %c0_0 = arith.constant 0 : index
    %0 = vector.load %arg1[%c0, %c0_0] : memref<512x16xbf16, #tpu.memory_space<vmem>>, vector<512x16xbf16>
    %c0_1 = arith.constant 0 : index
    %c0_2 = arith.constant 0 : index
    %1 = vector.load %arg3[%c0_1, %c0_2] : memref<16x32xbf16, #tpu.memory_space<vmem>>, vector<16x32xbf16>
    %cst = arith.constant dense<0.000000e+00> : vector<512x32xf32>
    %2 = tpu.matmul %0, %1, %cst {dimension_numbers = #tpu.dot_dimension_numbers<[1], [0], [0], [1], [0, 0, 1, 1], [], []>} : vector<512x16xbf16>, vector<16x32xbf16>, vector<512x32xf32> -> vector<512x32xf32>
    %c0_3 = arith.constant 0 : index
    %c0_4 = arith.constant 0 : index
    %3 = vector.load %arg2[%c0_3, %c0_4] : memref<512x5xbf16, #tpu.memory_space<vmem>>, vector<512x5xbf16>
    %c0_5 = arith.constant 0 : index
    %c0_6 = arith.constant 0 : index
    %4 = vector.load %arg4[%c0_5, %c0_6] : memref<5x32xbf16, #tpu.memory_space<vmem>>, vector<5x32xbf16>
    %cst_7 = arith.constant dense<0.000000e+00> : vector<512x32xf32>
    %5 = tpu.matmul %3, %4, %cst_7 {dimension_numbers = #tpu.dot_dimension_numbers<[1], [0], [0], [1], [0, 0, 1, 1], [], []>} : vector<512x5xbf16>, vector<5x32xbf16>, vector<512x32xf32> -> vector<512x32xf32>
    %6 = arith.addf %2, %5 : vector<512x32xf32>
    %c0_8 = arith.constant 0 : index
    %c0_9 = arith.constant 0 : index
    %7 = vector.load %arg5[%c0_8, %c0_9] : memref<1x32xf32, #tpu.memory_space<vmem>>, vector<1x32xf32>
    %8 = vector.broadcast %7 : vector<1x32xf32> to vector<512x32xf32>
    %9 = arith.addf %6, %8 : vector<512x32xf32>
    %10 = arith.truncf %9 : vector<512x32xf32> to vector<512x32xbf16>
    %c0_10 = arith.constant 0 : index
    %c0_11 = arith.constant 0 : index
    %11 = vector.load %arg6[%c0_10, %c0_11] : memref<512x32xbf16, #tpu.memory_space<vmem>>, vector<512x32xbf16>
    tpu.vector_store %arg6[%c0_10, %c0_11], %10 {strides = array<i32>} : memref<512x32xbf16, #tpu.memory_space<vmem>>, vector<512x32xbf16>,
    return
  }
  func.func @transform_0(%arg0: i32) -> (i32, i32) {
    %c0_i32 = arith.constant 0 : i32
    %c0_i32_0 = arith.constant 0 : i32
    return %arg0, %c0_i32 : i32, i32
  }
  func.func @transform_1(%arg0: i32) -> (i32, i32) {
    %c0_i32 = arith.constant 0 : i32
    %c0_i32_0 = arith.constant 0 : i32
    return %arg0, %c0_i32 : i32, i32
  }
  func.func @transform_2(%arg0: i32) -> (i32, i32) {
    %c0_i32 = arith.constant 0 : i32
    %c0_i32_0 = arith.constant 0 : i32
    %c0_i32_1 = arith.constant 0 : i32
    return %c0_i32, %c0_i32_0 : i32, i32
  }
  func.func @transform_3(%arg0: i32) -> (i32, i32) {
    %c0_i32 = arith.constant 0 : i32
    %c0_i32_0 = arith.constant 0 : i32
    %c0_i32_1 = arith.constant 0 : i32
    return %c0_i32, %c0_i32_0 : i32, i32
  }
  func.func @transform_4(%arg0: i32) -> (i32, i32) {
    %c0_i32 = arith.constant 0 : i32
    %c0_i32_0 = arith.constant 0 : i32
    %c0_i32_1 = arith.constant 0 : i32
    return %c0_i32, %c0_i32_0 : i32, i32
  }
  func.func @transform_5(%arg0: i32) -> (i32, i32) {
    %c0_i32 = arith.constant 0 : i32
    %c0_i32_0 = arith.constant 0 : i32
    return %arg0, %c0_i32 : i32, i32
  }
}

</mosaic_0001>

<llo_original>
// kernel: tpu_custom_call.1
$region0: #{tpu_custom_call.1}
  #allocation0 [shape = 'u32[]', space=smem, size = 0x4, offset = 0x4, fixed_abs, tag = 'smem constant byte address 0x4 - core index']
  #allocation1 [shape = 'u32[144,128]{1,0:T(1,128)}', space=vmem, size = 0x12000, scoped, tag = 'internal scratch']
  %s0 = inlined_call_operand.vmem [shape: bf16[4000,16], index: 0, kind: input, shape index: {}]
  %s1 = inlined_call_operand.vmem [shape: bf16[4000,5], index: 1, kind: input, shape index: {}]
  %s2 = inlined_call_operand.vmem [shape: bf16[16,32], index: 2, kind: input, shape index: {}]
  %s3 = inlined_call_operand.vmem [shape: bf16[5,32], index: 3, kind: input, shape index: {}]
  %s4 = inlined_call_operand.vmem [shape: f32[1,32], index: 4, kind: input, shape index: {}]
  %s5 = inlined_call_operand.vmem [shape: bf16[4000,32], index: 5, kind: output, shape index: {}]
  %s6 = sld [smem:[#allocation0]]
  $region97: #{tpu_custom_call.1} parent=0
    _
  %s8 = ssub.s32 1, %s6
  %s9 = scalar_select 0, %s8, %s6
  $region1: #{tpu_custom_call.1} parent=0
    #allocation2 [shape = 'u8[262144]{0}', space=vmem, size = 0x40000, scoped, tag = 'output window, operand 0']
    loop: start=0, step=1, limit=10
    $region2: #{tpu_custom_call.1} parent=1 // loop_pre_header
      _
    $region3: #{tpu_custom_call.1} parent=1 // loop_header
      %s11 = sphi 0, %s15
      %p12 = scmp.ge.s32.totalorder %s11, 10
      %s21 = sphi 0, %s23
      %s24 = sphi 0, %s21
      %s25 = sphi 0, %s24
      %s41 = sphi 0, %s25
      %s47 = sphi 0, %s49
      %s50 = sphi 0, %s47
      %s51 = sphi 0, %s50
      %s67 = sphi 0, %s51
      %s71 = sphi 0, %s71
      %s73 = sphi 0, %s71
      %s74 = sphi 0, %s73
      %s88 = sphi 0, %s74
      %s92 = sphi 0, %s92
      %s94 = sphi 0, %s92
      %s95 = sphi 0, %s94
      %s109 = sphi 0, %s95
      %s113 = sphi 0, %s113
      %s115 = sphi 0, %s113
      %s116 = sphi 0, %s115
      %s130 = sphi 0, %s116
      %s136 = sphi 0, %s138
      %s139 = sphi 0, %s136
      %s140 = sphi 0, %s139
      %s156 = sphi 0, %s140
    $region4: #{tpu_custom_call.1} parent=1 // loop_header_branch
      %14 = sbr.rel (%p12) target = $region8
    $region5: #{tpu_custom_call.1} parent=1 // loop_body
      %s16 = ssub.s32 %s11, 1
      %s17 = ssub.s32 %s11, 2
      %s18 = sadd.s32 %s11, 1
      %s19 = ssub.s32 %s11, %s18
      %p20 = scmp.eq.s32.totalorder %s19, 0
      %s22 = sadd.s32 %s21, 1
      %s23 = scalar_select %p20, %s21, %s22
      %p26 = pneg %p20
      %p27 = scmp.eq.s32.totalorder %s11, 7
      %p28 = por %p26, %p27
      %p29 = scmp.ne.s32.totalorder %s21, %s24
      %p30 = scmp.eq.s32.totalorder %s11, 0
      %p31 = por %p29, %p30
      %p32 = scmp.ne.s32.totalorder %s21, %s24
      %p33 = scmp.eq.s32.totalorder %s16, 7
      %p34 = por %p32, %p33
      %p35 = scmp.ne.s32.totalorder %s24, %s25
      %p36 = scmp.eq.s32.totalorder %s16, 0
      %p37 = por %p35, %p36
      %p38 = scmp.ne.s32.totalorder %s24, %s25
      %p39 = scmp.eq.s32.totalorder %s17, 7
      %p40 = por %p38, %p39
      %p42 = scmp.ne.s32.totalorder %s25, %s41
      %p43 = scmp.eq.s32.totalorder %s17, 0
      %p44 = por %p42, %p43
      %s45 = ssub.s32 %s11, %s18
      %p46 = scmp.eq.s32.totalorder %s45, 0
      %s48 = sadd.s32 %s47, 1
      %s49 = scalar_select %p46, %s47, %s48
      %p52 = pneg %p46
      %p53 = scmp.eq.s32.totalorder %s11, 7
      %p54 = por %p52, %p53
      %p55 = scmp.ne.s32.totalorder %s47, %s50
      %p56 = scmp.eq.s32.totalorder %s11, 0
      %p57 = por %p55, %p56
      %p58 = scmp.ne.s32.totalorder %s47, %s50
      %p59 = scmp.eq.s32.totalorder %s16, 7
      %p60 = por %p58, %p59
      %p61 = scmp.ne.s32.totalorder %s50, %s51
      %p62 = scmp.eq.s32.totalorder %s16, 0
      %p63 = por %p61, %p62
      %p64 = scmp.ne.s32.totalorder %s50, %s51
      %p65 = scmp.eq.s32.totalorder %s17, 7
      %p66 = por %p64, %p65
      %p68 = scmp.ne.s32.totalorder %s51, %s67
      %p69 = scmp.eq.s32.totalorder %s17, 0
      %p70 = por %p68, %p69
      %s72 = sadd.s32 %s71, 1
      %p75 = scmp.eq.s32.totalorder %s11, 7
      %p76 = scmp.ne.s32.totalorder %s71, %s73
      %p77 = scmp.eq.s32.totalorder %s11, 0
      %p78 = por %p76, %p77
      %p79 = scmp.ne.s32.totalorder %s71, %s73
      %p80 = scmp.eq.s32.totalorder %s16, 7
      %p81 = por %p79, %p80
      %p82 = scmp.ne.s32.totalorder %s73, %s74
      %p83 = scmp.eq.s32.totalorder %s16, 0
      %p84 = por %p82, %p83
      %p85 = scmp.ne.s32.totalorder %s73, %s74
      %p86 = scmp.eq.s32.totalorder %s17, 7
      %p87 = por %p85, %p86
      %p89 = scmp.ne.s32.totalorder %s74, %s88
      %p90 = scmp.eq.s32.totalorder %s17, 0
      %p91 = por %p89, %p90
      %s93 = sadd.s32 %s92, 1
      %p96 = scmp.eq.s32.totalorder %s11, 7
      %p97 = scmp.ne.s32.totalorder %s92, %s94
      %p98 = scmp.eq.s32.totalorder %s11, 0
      %p99 = por %p97, %p98
      %p100 = scmp.ne.s32.totalorder %s92, %s94
      %p101 = scmp.eq.s32.totalorder %s16, 7
      %p102 = por %p100, %p101
      %p103 = scmp.ne.s32.totalorder %s94, %s95
      %p104 = scmp.eq.s32.totalorder %s16, 0
      %p105 = por %p103, %p104
      %p106 = scmp.ne.s32.totalorder %s94, %s95
      %p107 = scmp.eq.s32.totalorder %s17, 7
      %p108 = por %p106, %p107
      %p110 = scmp.ne.s32.totalorder %s95, %s109
      %p111 = scmp.eq.s32.totalorder %s17, 0
      %p112 = por %p110, %p111
      %s114 = sadd.s32 %s113, 1
      %p117 = scmp.eq.s32.totalorder %s11, 7
      %p118 = scmp.ne.s32.totalorder %s113, %s115
      %p119 = scmp.eq.s32.totalorder %s11, 0
      %p120 = por %p118, %p119
      %p121 = scmp.ne.s32.totalorder %s113, %s115
      %p122 = scmp.eq.s32.totalorder %s16, 7
      %p123 = por %p121, %p122
      %p124 = scmp.ne.s32.totalorder %s115, %s116
      %p125 = scmp.eq.s32.totalorder %s16, 0
      %p126 = por %p124, %p125
      %p127 = scmp.ne.s32.totalorder %s115, %s116
      %p128 = scmp.eq.s32.totalorder %s17, 7
      %p129 = por %p127, %p128
      %p131 = scmp.ne.s32.totalorder %s116, %s130
      %p132 = scmp.eq.s32.totalorder %s17, 0
      %p133 = por %p131, %p132
      %s134 = ssub.s32 %s11, %s18
      %p135 = scmp.eq.s32.totalorder %s134, 0
      %s137 = sadd.s32 %s136, 1
      %s138 = scalar_select %p135, %s136, %s137
      %p141 = pneg %p135
      %p142 = scmp.eq.s32.totalorder %s11, 7
      %p143 = por %p141, %p142
      %p144 = scmp.ne.s32.totalorder %s136, %s139
      %p145 = scmp.eq.s32.totalorder %s11, 0
      %p146 = por %p144, %p145
      %p147 = scmp.ne.s32.totalorder %s136, %s139
      %p148 = scmp.eq.s32.totalorder %s16, 7
      %p149 = por %p147, %p148
      %p150 = scmp.ne.s32.totalorder %s139, %s140
      %p151 = scmp.eq.s32.totalorder %s16, 0
      %p152 = por %p150, %p151
      %p153 = scmp.ne.s32.totalorder %s139, %s140
      %p154 = scmp.eq.s32.totalorder %s17, 7
      %p155 = por %p153, %p154
      %p157 = scmp.ne.s32.totalorder %s140, %s156
      %p158 = scmp.eq.s32.totalorder %s17, 0
      %p159 = por %p157, %p158
      %p160 = scmp.le.s32.totalorder 1, %s11
      %p161 = scmp.lt.s32.totalorder %s11, 9
      %p162 = pnand %p160, %p161
      %p163 = pneg %p162
      // Predicated region
      $region9: #{tpu_custom_call.1} parent=5 // pred_check
        _
      $region10: #{tpu_custom_call.1} parent=5 // pred_check_branch
        %165 = sbr.rel (%p162) target = $region12
      $region11: #{tpu_custom_call.1} parent=5 // pred_region
        %s166 = ssub.s32 %s11, 1
        // Predicated region
        $region13: #{tpu_custom_call.1} parent=11 // pred_check
          %p167 = pneg %p84
        $region14: #{tpu_custom_call.1} parent=11 // pred_check_branch
          %169 = sbr.rel (%p167) target = $region16
        $region15: #{tpu_custom_call.1} parent=11 // pred_region
          _
        $region16: #{tpu_custom_call.1} parent=11 // pred_fallthru
          _
        // Predicated region
        $region17: #{tpu_custom_call.1} parent=11 // pred_check
          %p170 = pneg %p105
        $region18: #{tpu_custom_call.1} parent=11 // pred_check_branch
          %172 = sbr.rel (%p170) target = $region20
        $region19: #{tpu_custom_call.1} parent=11 // pred_region
          _
        $region20: #{tpu_custom_call.1} parent=11 // pred_fallthru
          _
        // Predicated region
        $region21: #{tpu_custom_call.1} parent=11 // pred_check
          %p173 = pneg %p126
        $region22: #{tpu_custom_call.1} parent=11 // pred_check_branch
          %175 = sbr.rel (%p173) target = $region24
        $region23: #{tpu_custom_call.1} parent=11 // pred_region
          _
        $region24: #{tpu_custom_call.1} parent=11 // pred_fallthru
          _
      $region12: #{tpu_custom_call.1} parent=5 // pred_fallthru
        _
      %p176 = scmp.lt.s32.totalorder %s11, 8
      // Predicated region
      $region25: #{tpu_custom_call.1} parent=5 // pred_check
        %p177 = pneg %p176
      $region26: #{tpu_custom_call.1} parent=5 // pred_check_branch
        %179 = sbr.rel (%p177) target = $region28
      $region27: #{tpu_custom_call.1} parent=5 // pred_region
        // Predicated region
        $region29: #{tpu_custom_call.1} parent=27 // pred_check
          %p180 = pneg %p31
        $region30: #{tpu_custom_call.1} parent=27 // pred_check_branch
          %182 = sbr.rel (%p180) target = $region32
        $region31: #{tpu_custom_call.1} parent=27 // pred_region
          %s183 = smul.u32 64, %s11
          %s184 = ssub.s32 500, %s183
          %p185 = scmp.lt.s32.totalorder %s184, 64
          %s186 = scalar_select %p185, %s184, 64
          %s187 = smul.u32 64, %s186
          %p188 = scmp.lt.s32.totalorder %s183, 499
          %s189 = scalar_select %p188, %s183, 499
          %s190 = smul.addr %s189, 4
          %s191 = scalar_lea.vmem %s0, %s190
          %s192 = smul.u32 64, %s11
          %s193 = ssub.s32 500, %s192
          %p194 = scmp.lt.s32.totalorder %s193, 64
          %s195 = scalar_select %p194, %s193, 64
          %s196 = smul.u32 64, %s195
        $region32: #{tpu_custom_call.1} parent=27 // pred_fallthru
          _
        // Predicated region
        $region33: #{tpu_custom_call.1} parent=27 // pred_check
          %p197 = pneg %p57
        $region34: #{tpu_custom_call.1} parent=27 // pred_check_branch
          %199 = sbr.rel (%p197) target = $region36
        $region35: #{tpu_custom_call.1} parent=27 // pred_region
          %s200 = smul.u32 64, %s11
          %s201 = ssub.s32 500, %s200
          %p202 = scmp.lt.s32.totalorder %s201, 64
          %s203 = scalar_select %p202, %s201, 64
          %s204 = smul.u32 64, %s203
          %p205 = scmp.lt.s32.totalorder %s200, 499
          %s206 = scalar_select %p205, %s200, 499
          %s207 = smul.addr %s206, 4
          %s208 = scalar_lea.vmem %s1, %s207
          %s209 = smul.u32 64, %s11
          %s210 = ssub.s32 500, %s209
          %p211 = scmp.lt.s32.totalorder %s210, 64
          %s212 = scalar_select %p211, %s210, 64
          %s213 = smul.u32 64, %s212
        $region36: #{tpu_custom_call.1} parent=27 // pred_fallthru
          _
      $region28: #{tpu_custom_call.1} parent=5 // pred_fallthru
        _
      %p214 = scmp.le.s32.totalorder 1, %s11
      %p215 = scmp.lt.s32.totalorder %s11, 9
      %p216 = pnand %p214, %p215
      %p217 = pneg %p216
      // Predicated region
      $region37: #{tpu_custom_call.1} parent=5 // pred_check
        _
      $region38: #{tpu_custom_call.1} parent=5 // pred_check_branch
        %219 = sbr.rel (%p216) target = $region40
      $region39: #{tpu_custom_call.1} parent=5 // pred_region
        %s220 = ssub.s32 %s11, 1
        %s221 = smul.u32 64, %s16
        %s222 = ssub.s32 500, %s221
        %p223 = scmp.lt.s32.totalorder %s222, 64
        %s224 = scalar_select %p223, %s222, 64
        %s225 = smul.u32 64, %s224
        %p226 = scmp.lt.s32.totalorder %s221, 499
        %s227 = scalar_select %p226, %s221, 499
        %s228 = smul.addr %s227, 4
        %s229 = scalar_lea.vmem %s0, %s228
        %p230 = pneg %p37
        %p231 = pneg %p34
        %s232 = smul.u32 64, %s16
        %s233 = ssub.s32 500, %s232
        %p234 = scmp.lt.s32.totalorder %s233, 64
        %s235 = scalar_select %p234, %s233, 64
        %s236 = smul.u32 64, %s235
        %p237 = scmp.lt.s32.totalorder %s232, 499
        %s238 = scalar_select %p237, %s232, 499
        %s239 = smul.addr %s238, 4
        %s240 = scalar_lea.vmem %s1, %s239
        %p241 = pneg %p63
        %p242 = pneg %p60
        %p243 = pneg %p84
        %p244 = pneg %p81
        %p245 = pneg %p105
        %p246 = pneg %p102
        %p247 = pneg %p126
        %p248 = pneg %p123
        %p249 = pneg %p152
        %p250 = pneg %p149
        %s251 = sand.u32 %s139, 1
        %s252 = sand.u32 %s139, 1
        %s253 = smul.addr %s252, 256
        %s254 = scalar_lea.vmem [#allocation2], %s253
        %s255 = smul.u32 64, %s16
        %s256 = ssub.s32 500, %s255
        %p257 = scmp.lt.s32.totalorder %s256, 64
        %s258 = scalar_select %p257, %s256, 64
        %s259 = smul.u32 64, %s258
        %p260 = scmp.lt.s32.totalorder %s255, 499
        %s261 = scalar_select %p260, %s255, 499
        %s262 = smul.addr %s261, 4
        %s263 = scalar_lea.vmem %s0, %s262
        %s264 = smul.u32 64, %s16
        %s265 = ssub.s32 500, %s264
        %p266 = scmp.lt.s32.totalorder %s265, 64
        %s267 = scalar_select %p266, %s265, 64
        %s268 = smul.u32 64, %s267
        %s269 = smul.u32 64, %s16
        %s270 = ssub.s32 500, %s269
        %p271 = scmp.lt.s32.totalorder %s270, 64
        %s272 = scalar_select %p271, %s270, 64
        %s273 = smul.u32 64, %s272
        %p274 = scmp.lt.s32.totalorder %s269, 499
        %s275 = scalar_select %p274, %s269, 499
        %s276 = smul.addr %s275, 4
        %s277 = scalar_lea.vmem %s1, %s276
        %s278 = smul.u32 64, %s16
        %s279 = ssub.s32 500, %s278
        %p280 = scmp.lt.s32.totalorder %s279, 64
        %s281 = scalar_select %p280, %s279, 64
        %s282 = smul.u32 64, %s281
        %s283 = smul.u32 64, %s16
        %s284 = ssub.s32 500, %s283
        %p285 = scmp.lt.s32.totalorder %s284, 64
        %s286 = scalar_select %p285, %s284, 64
        %s287 = smul.u32 64, %s286
        %v289 = vld [vmem:[%s263] sm:$0xf]
        %v290 = vld [vmem:[%s263 + $0x4] sm:$0xf]
        %v291 = vld [vmem:[%s263 + $0x8] sm:$0xf]
        %v292 = vld [vmem:[%s263 + $0xc] sm:$0xf]
        %v293 = vld [vmem:[%s263 + $0x10] sm:$0xf]
        %v294 = vld [vmem:[%s263 + $0x14] sm:$0xf]
        %v295 = vld [vmem:[%s263 + $0x18] sm:$0xf]
        %v296 = vld [vmem:[%s263 + $0x1c] sm:$0xf]
        %v297 = vld [vmem:[%s263 + $0x20] sm:$0xf]
        %v298 = vld [vmem:[%s263 + $0x24] sm:$0xf]
        %v299 = vld [vmem:[%s263 + $0x28] sm:$0xf]
        %v300 = vld [vmem:[%s263 + $0x2c] sm:$0xf]
        %v301 = vld [vmem:[%s263 + $0x30] sm:$0xf]
        %v302 = vld [vmem:[%s263 + $0x34] sm:$0xf]
        %v303 = vld [vmem:[%s263 + $0x38] sm:$0xf]
        %v304 = vld [vmem:[%s263 + $0x3c] sm:$0xf]
        %v305 = vld [vmem:[%s263 + $0x40] sm:$0xf]
        %v306 = vld [vmem:[%s263 + $0x44] sm:$0xf]
        %v307 = vld [vmem:[%s263 + $0x48] sm:$0xf]
        %v308 = vld [vmem:[%s263 + $0x4c] sm:$0xf]
        %v309 = vld [vmem:[%s263 + $0x50] sm:$0xf]
        %v310 = vld [vmem:[%s263 + $0x54] sm:$0xf]
        %v311 = vld [vmem:[%s263 + $0x58] sm:$0xf]
        %v312 = vld [vmem:[%s263 + $0x5c] sm:$0xf]
        %v313 = vld [vmem:[%s263 + $0x60] sm:$0xf]
        %v314 = vld [vmem:[%s263 + $0x64] sm:$0xf]
        %v315 = vld [vmem:[%s263 + $0x68] sm:$0xf]
        %v316 = vld [vmem:[%s263 + $0x6c] sm:$0xf]
        %v317 = vld [vmem:[%s263 + $0x70] sm:$0xf]
        %v318 = vld [vmem:[%s263 + $0x74] sm:$0xf]
        %v319 = vld [vmem:[%s263 + $0x78] sm:$0xf]
        %v320 = vld [vmem:[%s263 + $0x7c] sm:$0xf]
        %v321 = vld [vmem:[%s263 + $0x80] sm:$0xf]
        %v322 = vld [vmem:[%s263 + $0x84] sm:$0xf]
        %v323 = vld [vmem:[%s263 + $0x88] sm:$0xf]
        %v324 = vld [vmem:[%s263 + $0x8c] sm:$0xf]
        %v325 = vld [vmem:[%s263 + $0x90] sm:$0xf]
        %v326 = vld [vmem:[%s263 + $0x94] sm:$0xf]
        %v327 = vld [vmem:[%s263 + $0x98] sm:$0xf]
        %v328 = vld [vmem:[%s263 + $0x9c] sm:$0xf]
        %v329 = vld [vmem:[%s263 + $0xa0] sm:$0xf]
        %v330 = vld [vmem:[%s263 + $0xa4] sm:$0xf]
        %v331 = vld [vmem:[%s263 + $0xa8] sm:$0xf]
        %v332 = vld [vmem:[%s263 + $0xac] sm:$0xf]
        %v333 = vld [vmem:[%s263 + $0xb0] sm:$0xf]
        %v334 = vld [vmem:[%s263 + $0xb4] sm:$0xf]
        %v335 = vld [vmem:[%s263 + $0xb8] sm:$0xf]
        %v336 = vld [vmem:[%s263 + $0xbc] sm:$0xf]
        %v337 = vld [vmem:[%s263 + $0xc0] sm:$0xf]
        %v338 = vld [vmem:[%s263 + $0xc4] sm:$0xf]
        %v339 = vld [vmem:[%s263 + $0xc8] sm:$0xf]
        %v340 = vld [vmem:[%s263 + $0xcc] sm:$0xf]
        %v341 = vld [vmem:[%s263 + $0xd0] sm:$0xf]
        %v342 = vld [vmem:[%s263 + $0xd4] sm:$0xf]
        %v343 = vld [vmem:[%s263 + $0xd8] sm:$0xf]
        %v344 = vld [vmem:[%s263 + $0xdc] sm:$0xf]
        %v345 = vld [vmem:[%s263 + $0xe0] sm:$0xf]
        %v346 = vld [vmem:[%s263 + $0xe4] sm:$0xf]
        %v347 = vld [vmem:[%s263 + $0xe8] sm:$0xf]
        %v348 = vld [vmem:[%s263 + $0xec] sm:$0xf]
        %v349 = vld [vmem:[%s263 + $0xf0] sm:$0xf]
        %v350 = vld [vmem:[%s263 + $0xf4] sm:$0xf]
        %v351 = vld [vmem:[%s263 + $0xf8] sm:$0xf]
        %v352 = vld [vmem:[%s263 + $0xfc] sm:$0xf]
        %v353 = vld [vmem:[%s2] sm:$0xf]
        %v354 = vld [vmem:[%s2 + $0x4] sm:$0xf]
        %v355 = vld [vmem:[%s277] sm:$0xf]
        %v356 = vld [vmem:[%s277 + $0x4] sm:$0xf]
        %v357 = vld [vmem:[%s277 + $0x8] sm:$0xf]
        %v358 = vld [vmem:[%s277 + $0xc] sm:$0xf]
        %v359 = vld [vmem:[%s277 + $0x10] sm:$0xf]
        %v360 = vld [vmem:[%s277 + $0x14] sm:$0xf]
        %v361 = vld [vmem:[%s277 + $0x18] sm:$0xf]
        %v362 = vld [vmem:[%s277 + $0x1c] sm:$0xf]
        %v363 = vld [vmem:[%s277 + $0x20] sm:$0xf]
        %v364 = vld [vmem:[%s277 + $0x24] sm:$0xf]
        %v365 = vld [vmem:[%s277 + $0x28] sm:$0xf]
        %v366 = vld [vmem:[%s277 + $0x2c] sm:$0xf]
        %v367 = vld [vmem:[%s277 + $0x30] sm:$0xf]
        %v368 = vld [vmem:[%s277 + $0x34] sm:$0xf]
        %v369 = vld [vmem:[%s277 + $0x38] sm:$0xf]
        %v370 = vld [vmem:[%s277 + $0x3c] sm:$0xf]
        %v371 = vld [vmem:[%s277 + $0x40] sm:$0xf]
        %v372 = vld [vmem:[%s277 + $0x44] sm:$0xf]
        %v373 = vld [vmem:[%s277 + $0x48] sm:$0xf]
        %v374 = vld [vmem:[%s277 + $0x4c] sm:$0xf]
        %v375 = vld [vmem:[%s277 + $0x50] sm:$0xf]
        %v376 = vld [vmem:[%s277 + $0x54] sm:$0xf]
        %v377 = vld [vmem:[%s277 + $0x58] sm:$0xf]
        %v378 = vld [vmem:[%s277 + $0x5c] sm:$0xf]
        %v379 = vld [vmem:[%s277 + $0x60] sm:$0xf]
        %v380 = vld [vmem:[%s277 + $0x64] sm:$0xf]
        %v381 = vld [vmem:[%s277 + $0x68] sm:$0xf]
        %v382 = vld [vmem:[%s277 + $0x6c] sm:$0xf]
        %v383 = vld [vmem:[%s277 + $0x70] sm:$0xf]
        %v384 = vld [vmem:[%s277 + $0x74] sm:$0xf]
        %v385 = vld [vmem:[%s277 + $0x78] sm:$0xf]
        %v386 = vld [vmem:[%s277 + $0x7c] sm:$0xf]
        %v387 = vld [vmem:[%s277 + $0x80] sm:$0xf]
        %v388 = vld [vmem:[%s277 + $0x84] sm:$0xf]
        %v389 = vld [vmem:[%s277 + $0x88] sm:$0xf]
        %v390 = vld [vmem:[%s277 + $0x8c] sm:$0xf]
        %v391 = vld [vmem:[%s277 + $0x90] sm:$0xf]
        %v392 = vld [vmem:[%s277 + $0x94] sm:$0xf]
        %v393 = vld [vmem:[%s277 + $0x98] sm:$0xf]
        %v394 = vld [vmem:[%s277 + $0x9c] sm:$0xf]
        %v395 = vld [vmem:[%s277 + $0xa0] sm:$0xf]
        %v396 = vld [vmem:[%s277 + $0xa4] sm:$0xf]
        %v397 = vld [vmem:[%s277 + $0xa8] sm:$0xf]
        %v398 = vld [vmem:[%s277 + $0xac] sm:$0xf]
        %v399 = vld [vmem:[%s277 + $0xb0] sm:$0xf]
        %v400 = vld [vmem:[%s277 + $0xb4] sm:$0xf]
        %v401 = vld [vmem:[%s277 + $0xb8] sm:$0xf]
        %v402 = vld [vmem:[%s277 + $0xbc] sm:$0xf]
        %v403 = vld [vmem:[%s277 + $0xc0] sm:$0xf]
        %v404 = vld [vmem:[%s277 + $0xc4] sm:$0xf]
        %v405 = vld [vmem:[%s277 + $0xc8] sm:$0xf]
        %v406 = vld [vmem:[%s277 + $0xcc] sm:$0xf]
        %v407 = vld [vmem:[%s277 + $0xd0] sm:$0xf]
        %v408 = vld [vmem:[%s277 + $0xd4] sm:$0xf]
        %v409 = vld [vmem:[%s277 + $0xd8] sm:$0xf]
        %v410 = vld [vmem:[%s277 + $0xdc] sm:$0xf]
        %v411 = vld [vmem:[%s277 + $0xe0] sm:$0xf]
        %v412 = vld [vmem:[%s277 + $0xe4] sm:$0xf]
        %v413 = vld [vmem:[%s277 + $0xe8] sm:$0xf]
        %v414 = vld [vmem:[%s277 + $0xec] sm:$0xf]
        %v415 = vld [vmem:[%s277 + $0xf0] sm:$0xf]
        %v416 = vld [vmem:[%s277 + $0xf4] sm:$0xf]
        %v417 = vld [vmem:[%s277 + $0xf8] sm:$0xf]
        %v418 = vld [vmem:[%s277 + $0xfc] sm:$0xf]
        %v419 = vld [vmem:[%s3] sm:$0x7]
        %v484 = vunpack.c.l.b16 %v355
        %v485 = vunpack.c.l.b16 %v356
        %v486 = vunpack.c.l.b16 %v357
        %v487 = vunpack.c.l.b16 %v358
        %v488 = vunpack.c.l.b16 %v359
        %v489 = vunpack.c.l.b16 %v360
        %v490 = vunpack.c.l.b16 %v361
        %v491 = vunpack.c.l.b16 %v362
        %v492 = vunpack.c.l.b16 %v363
        %v493 = vunpack.c.l.b16 %v364
        %v494 = vunpack.c.l.b16 %v365
        %v495 = vunpack.c.l.b16 %v366
        %v496 = vunpack.c.l.b16 %v367
        %v497 = vunpack.c.l.b16 %v368
        %v498 = vunpack.c.l.b16 %v369
        %v499 = vunpack.c.l.b16 %v370
        %v500 = vunpack.c.l.b16 %v371
        %v501 = vunpack.c.l.b16 %v372
        %v502 = vunpack.c.l.b16 %v373
        %v503 = vunpack.c.l.b16 %v374
        %v504 = vunpack.c.l.b16 %v375
        %v505 = vunpack.c.l.b16 %v376
        %v506 = vunpack.c.l.b16 %v377
        %v507 = vunpack.c.l.b16 %v378
        %v508 = vunpack.c.l.b16 %v379
        %v509 = vunpack.c.l.b16 %v380
        %v510 = vunpack.c.l.b16 %v381
        %v511 = vunpack.c.l.b16 %v382
        %v512 = vunpack.c.l.b16 %v383
        %v513 = vunpack.c.l.b16 %v384
        %v514 = vunpack.c.l.b16 %v385
        %v515 = vunpack.c.l.b16 %v386
        %v516 = vunpack.c.l.b16 %v387
        %v517 = vunpack.c.l.b16 %v388
        %v518 = vunpack.c.l.b16 %v389
        %v519 = vunpack.c.l.b16 %v390
        %v520 = vunpack.c.l.b16 %v391
        %v521 = vunpack.c.l.b16 %v392
        %v522 = vunpack.c.l.b16 %v393
        %v523 = vunpack.c.l.b16 %v394
        %v524 = vunpack.c.l.b16 %v395
        %v525 = vunpack.c.l.b16 %v396
        %v526 = vunpack.c.l.b16 %v397
        %v527 = vunpack.c.l.b16 %v398
        %v528 = vunpack.c.l.b16 %v399
        %v529 = vunpack.c.l.b16 %v400
        %v530 = vunpack.c.l.b16 %v401
        %v531 = vunpack.c.l.b16 %v402
        %v532 = vunpack.c.l.b16 %v403
        %v533 = vunpack.c.l.b16 %v404
        %v534 = vunpack.c.l.b16 %v405
        %v535 = vunpack.c.l.b16 %v406
        %v536 = vunpack.c.l.b16 %v407
        %v537 = vunpack.c.l.b16 %v408
        %v538 = vunpack.c.l.b16 %v409
        %v539 = vunpack.c.l.b16 %v410
        %v540 = vunpack.c.l.b16 %v411
        %v541 = vunpack.c.l.b16 %v412
        %v542 = vunpack.c.l.b16 %v413
        %v543 = vunpack.c.l.b16 %v414
        %v544 = vunpack.c.l.b16 %v415
        %v545 = vunpack.c.l.b16 %v416
        %v546 = vunpack.c.l.b16 %v417
        %v547 = vunpack.c.l.b16 %v418
        %v548 = vpack.c.b16 %v485, %v484
        %v549 = vpack.c.b16 %v487, %v486
        %v550 = vpack.c.b16 %v489, %v488
        %v551 = vpack.c.b16 %v491, %v490
        %v552 = vpack.c.b16 %v493, %v492
        %v553 = vpack.c.b16 %v495, %v494
        %v554 = vpack.c.b16 %v497, %v496
        %v555 = vpack.c.b16 %v499, %v498
        %v556 = vpack.c.b16 %v501, %v500
        %v557 = vpack.c.b16 %v503, %v502
        %v558 = vpack.c.b16 %v505, %v504
        %v559 = vpack.c.b16 %v507, %v506
        %v560 = vpack.c.b16 %v509, %v508
        %v561 = vpack.c.b16 %v511, %v510
        %v562 = vpack.c.b16 %v513, %v512
        %v563 = vpack.c.b16 %v515, %v514
        %v564 = vpack.c.b16 %v517, %v516
        %v565 = vpack.c.b16 %v519, %v518
        %v566 = vpack.c.b16 %v521, %v520
        %v567 = vpack.c.b16 %v523, %v522
        %v568 = vpack.c.b16 %v525, %v524
        %v569 = vpack.c.b16 %v527, %v526
        %v570 = vpack.c.b16 %v529, %v528
        %v571 = vpack.c.b16 %v531, %v530
        %v572 = vpack.c.b16 %v533, %v532
        %v573 = vpack.c.b16 %v535, %v534
        %v574 = vpack.c.b16 %v537, %v536
        %v575 = vpack.c.b16 %v539, %v538
        %v576 = vpack.c.b16 %v541, %v540
        %v577 = vpack.c.b16 %v543, %v542
        %v578 = vpack.c.b16 %v545, %v544
        %v579 = vpack.c.b16 %v547, %v546
        %vm580 = vcmask 39936
        %v582 = vsel %vm580, %v548, 0
        %v585 = vsel %vm580, %v549, 0
        %v588 = vsel %vm580, %v550, 0
        %v591 = vsel %vm580, %v551, 0
        %v594 = vsel %vm580, %v552, 0
        %v597 = vsel %vm580, %v553, 0
        %v600 = vsel %vm580, %v554, 0
        %v603 = vsel %vm580, %v555, 0
        %v606 = vsel %vm580, %v556, 0
        %v609 = vsel %vm580, %v557, 0
        %v612 = vsel %vm580, %v558, 0
        %v615 = vsel %vm580, %v559, 0
        %v618 = vsel %vm580, %v560, 0
        %v621 = vsel %vm580, %v561, 0
        %v624 = vsel %vm580, %v562, 0
        %v627 = vsel %vm580, %v563, 0
        %v630 = vsel %vm580, %v564, 0
        %v633 = vsel %vm580, %v565, 0
        %v636 = vsel %vm580, %v566, 0
        %v639 = vsel %vm580, %v567, 0
        %v642 = vsel %vm580, %v568, 0
        %v645 = vsel %vm580, %v569, 0
        %v648 = vsel %vm580, %v570, 0
        %v651 = vsel %vm580, %v571, 0
        %v654 = vsel %vm580, %v572, 0
        %v657 = vsel %vm580, %v573, 0
        %v660 = vsel %vm580, %v574, 0
        %v663 = vsel %vm580, %v575, 0
        %v666 = vsel %vm580, %v576, 0
        %v669 = vsel %vm580, %v577, 0
        %v672 = vsel %vm580, %v578, 0
        %v675 = vsel %vm580, %v579, 0
        %vm677 = vcmask 1041408
        %vm678 = vcmask 1042432
        %v679 = vsel %vm677, 4294967295, 65535
        %v680 = vsel %vm678, %v679, 0
        %v682 = vand.u32 %v419, %v680
        %684 = vmatprep.subr.bf16.mxu0 0
        %685 = vmatpush1.bf16.msra.mxu0 0
        %686 = vmatprep.subr.bf16.mxu0 0
        %687 = vmatpush1.bf16.msra.mxu0 0
        %688 = vmatprep.subr.bf16.mxu0 0
        %689 = vmatpush1.bf16.msra.mxu0 0
        %690 = vmatprep.subr.bf16.mxu0 0
        %691 = vmatpush1.bf16.msra.mxu0 0
        %692 = vmatprep.subr.bf16.mxu0 0
        %693 = vmatpush1.bf16.msra.mxu0 0
        %694 = vmatprep.subr.bf16.mxu0 0
        %695 = vmatpush1.bf16.msra.mxu0 0
        %696 = vmatprep.subr.bf16.mxu0 0
        %697 = vmatpush1.bf16.msra.mxu0 0
        %698 = vmatprep.subr.bf16.mxu0 0
        %699 = vmatpush1.bf16.msra.mxu0 %v682
        %700 = vmatprep.subr.bf16.mxu0 0
        %701 = vmatpush2.bf16.msra.mxu0 0
        %702 = vmatprep.subr.bf16.mxu0 0
        %703 = vmatpush2.bf16.msra.mxu0 0
        %704 = vmatprep.subr.bf16.mxu0 0
        %705 = vmatpush2.bf16.msra.mxu0 0
        %706 = vmatprep.subr.bf16.mxu0 0
        %707 = vmatpush2.bf16.msra.mxu0 0
        %708 = vmatprep.subr.bf16.mxu0 0
        %709 = vmatpush2.bf16.msra.mxu0 0
        %710 = vmatprep.subr.bf16.mxu0 0
        %711 = vmatpush2.bf16.msra.mxu0 0
        %712 = vmatprep.subr.bf16.mxu0 0
        %713 = vmatpush2.bf16.msra.mxu0 0
        %714 = vmatprep.subr.bf16.mxu0 0
        %715 = vmatpush2.bf16.msra.mxu0 0
        %716 = vmatprep.mubr.bf16.mxu0 0
        %717 = vmatmul.mubr.bf16.gmra.mxu0 %v582
        %v718 = vpop.f32.mrf.mxu0
        %v719 = vadd.f32 0.0, %v718
        %v720 = vpop.f32.mrf.mxu0
        %v721 = vpop.f32.mrf.mxu0
        %v722 = vadd.f32 0.0, %v721
        %v723 = vpop.f32.mrf.mxu0
        %724 = vmatprep.mubr.bf16.mxu0 0
        %725 = vmatmul.mubr.bf16.gmra.mxu0 %v585
        %v726 = vpop.f32.mrf.mxu0
        %v727 = vadd.f32 0.0, %v726
        %v728 = vpop.f32.mrf.mxu0
        %v729 = vpop.f32.mrf.mxu0
        %v730 = vadd.f32 0.0, %v729
        %v731 = vpop.f32.mrf.mxu0
        %732 = vmatprep.mubr.bf16.mxu0 0
        %733 = vmatmul.mubr.bf16.gmra.mxu0 %v588
        %v734 = vpop.f32.mrf.mxu0
        %v735 = vadd.f32 0.0, %v734
        %v736 = vpop.f32.mrf.mxu0
        %v737 = vpop.f32.mrf.mxu0
        %v738 = vadd.f32 0.0, %v737
        %v739 = vpop.f32.mrf.mxu0
        %740 = vmatprep.mubr.bf16.mxu0 0
        %741 = vmatmul.mubr.bf16.gmra.mxu0 %v591
        %v742 = vpop.f32.mrf.mxu0
        %v743 = vadd.f32 0.0, %v742
        %v744 = vpop.f32.mrf.mxu0
        %v745 = vpop.f32.mrf.mxu0
        %v746 = vadd.f32 0.0, %v745
        %v747 = vpop.f32.mrf.mxu0
        %748 = vmatprep.mubr.bf16.mxu0 0
        %749 = vmatmul.mubr.bf16.gmra.mxu0 %v594
        %v750 = vpop.f32.mrf.mxu0
        %v751 = vadd.f32 0.0, %v750
        %v752 = vpop.f32.mrf.mxu0
        %v753 = vpop.f32.mrf.mxu0
        %v754 = vadd.f32 0.0, %v753
        %v755 = vpop.f32.mrf.mxu0
        %756 = vmatprep.mubr.bf16.mxu0 0
        %757 = vmatmul.mubr.bf16.gmra.mxu0 %v597
        %v758 = vpop.f32.mrf.mxu0
        %v759 = vadd.f32 0.0, %v758
        %v760 = vpop.f32.mrf.mxu0
        %v761 = vpop.f32.mrf.mxu0
        %v762 = vadd.f32 0.0, %v761
        %v763 = vpop.f32.mrf.mxu0
        %764 = vmatprep.mubr.bf16.mxu0 0
        %765 = vmatmul.mubr.bf16.gmra.mxu0 %v600
        %v766 = vpop.f32.mrf.mxu0
        %v767 = vadd.f32 0.0, %v766
        %v768 = vpop.f32.mrf.mxu0
        %v769 = vpop.f32.mrf.mxu0
        %v770 = vadd.f32 0.0, %v769
        %v771 = vpop.f32.mrf.mxu0
        %772 = vmatprep.mubr.bf16.mxu0 0
        %773 = vmatmul.mubr.bf16.gmra.mxu0 %v603
        %v774 = vpop.f32.mrf.mxu0
        %v775 = vadd.f32 0.0, %v774
        %v776 = vpop.f32.mrf.mxu0
        %v777 = vpop.f32.mrf.mxu0
        %v778 = vadd.f32 0.0, %v777
        %v779 = vpop.f32.mrf.mxu0
        %780 = vmatprep.mubr.bf16.mxu0 0
        %781 = vmatmul.mubr.bf16.gmra.mxu0 %v606
        %v782 = vpop.f32.mrf.mxu0
        %v783 = vadd.f32 0.0, %v782
        %v784 = vpop.f32.mrf.mxu0
        %v785 = vpop.f32.mrf.mxu0
        %v786 = vadd.f32 0.0, %v785
        %v787 = vpop.f32.mrf.mxu0
        %788 = vmatprep.mubr.bf16.mxu0 0
        %789 = vmatmul.mubr.bf16.gmra.mxu0 %v609
        %v790 = vpop.f32.mrf.mxu0
        %v791 = vadd.f32 0.0, %v790
        %v792 = vpop.f32.mrf.mxu0
        %v793 = vpop.f32.mrf.mxu0
        %v794 = vadd.f32 0.0, %v793
        %v795 = vpop.f32.mrf.mxu0
        %796 = vmatprep.mubr.bf16.mxu0 0
        %797 = vmatmul.mubr.bf16.gmra.mxu0 %v612
        %v798 = vpop.f32.mrf.mxu0
        %v799 = vadd.f32 0.0, %v798
        %v800 = vpop.f32.mrf.mxu0
        %v801 = vpop.f32.mrf.mxu0
        %v802 = vadd.f32 0.0, %v801
        %v803 = vpop.f32.mrf.mxu0
        %804 = vmatprep.mubr.bf16.mxu0 0
        %805 = vmatmul.mubr.bf16.gmra.mxu0 %v615
        %v806 = vpop.f32.mrf.mxu0
        %v807 = vadd.f32 0.0, %v806
        %v808 = vpop.f32.mrf.mxu0
        %v809 = vpop.f32.mrf.mxu0
        %v810 = vadd.f32 0.0, %v809
        %v811 = vpop.f32.mrf.mxu0
        %812 = vmatprep.mubr.bf16.mxu0 0
        %813 = vmatmul.mubr.bf16.gmra.mxu0 %v618
        %v814 = vpop.f32.mrf.mxu0
        %v815 = vadd.f32 0.0, %v814
        %v816 = vpop.f32.mrf.mxu0
        %v817 = vpop.f32.mrf.mxu0
        %v818 = vadd.f32 0.0, %v817
        %v819 = vpop.f32.mrf.mxu0
        %820 = vmatprep.mubr.bf16.mxu0 0
        %821 = vmatmul.mubr.bf16.gmra.mxu0 %v621
        %v822 = vpop.f32.mrf.mxu0
        %v823 = vadd.f32 0.0, %v822
        %v824 = vpop.f32.mrf.mxu0
        %v825 = vpop.f32.mrf.mxu0
        %v826 = vadd.f32 0.0, %v825
        %v827 = vpop.f32.mrf.mxu0
        %828 = vmatprep.mubr.bf16.mxu0 0
        %829 = vmatmul.mubr.bf16.gmra.mxu0 %v624
        %v830 = vpop.f32.mrf.mxu0
        %v831 = vadd.f32 0.0, %v830
        %v832 = vpop.f32.mrf.mxu0
        %v833 = vpop.f32.mrf.mxu0
        %v834 = vadd.f32 0.0, %v833
        %v835 = vpop.f32.mrf.mxu0
        %836 = vmatprep.mubr.bf16.mxu0 0
        %837 = vmatmul.mubr.bf16.gmra.mxu0 %v627
        %v838 = vpop.f32.mrf.mxu0
        %v839 = vadd.f32 0.0, %v838
        %v840 = vpop.f32.mrf.mxu0
        %v841 = vpop.f32.mrf.mxu0
        %v842 = vadd.f32 0.0, %v841
        %v843 = vpop.f32.mrf.mxu0
        %844 = vmatprep.mubr.bf16.mxu0 0
        %845 = vmatmul.mubr.bf16.gmra.mxu0 %v630
        %v846 = vpop.f32.mrf.mxu0
        %v847 = vadd.f32 0.0, %v846
        %v848 = vpop.f32.mrf.mxu0
        %v849 = vpop.f32.mrf.mxu0
        %v850 = vadd.f32 0.0, %v849
        %v851 = vpop.f32.mrf.mxu0
        %852 = vmatprep.mubr.bf16.mxu0 0
        %853 = vmatmul.mubr.bf16.gmra.mxu0 %v633
        %v854 = vpop.f32.mrf.mxu0
        %v855 = vadd.f32 0.0, %v854
        %v856 = vpop.f32.mrf.mxu0
        %v857 = vpop.f32.mrf.mxu0
        %v858 = vadd.f32 0.0, %v857
        %v859 = vpop.f32.mrf.mxu0
        %860 = vmatprep.mubr.bf16.mxu0 0
        %861 = vmatmul.mubr.bf16.gmra.mxu0 %v636
        %v862 = vpop.f32.mrf.mxu0
        %v863 = vadd.f32 0.0, %v862
        %v864 = vpop.f32.mrf.mxu0
        %v865 = vpop.f32.mrf.mxu0
        %v866 = vadd.f32 0.0, %v865
        %v867 = vpop.f32.mrf.mxu0
        %868 = vmatprep.mubr.bf16.mxu0 0
        %869 = vmatmul.mubr.bf16.gmra.mxu0 %v639
        %v870 = vpop.f32.mrf.mxu0
        %v871 = vadd.f32 0.0, %v870
        %v872 = vpop.f32.mrf.mxu0
        %v873 = vpop.f32.mrf.mxu0
        %v874 = vadd.f32 0.0, %v873
        %v875 = vpop.f32.mrf.mxu0
        %876 = vmatprep.mubr.bf16.mxu0 0
        %877 = vmatmul.mubr.bf16.gmra.mxu0 %v642
        %v878 = vpop.f32.mrf.mxu0
        %v879 = vadd.f32 0.0, %v878
        %v880 = vpop.f32.mrf.mxu0
        %v881 = vpop.f32.mrf.mxu0
        %v882 = vadd.f32 0.0, %v881
        %v883 = vpop.f32.mrf.mxu0
        %884 = vmatprep.mubr.bf16.mxu0 0
        %885 = vmatmul.mubr.bf16.gmra.mxu0 %v645
        %v886 = vpop.f32.mrf.mxu0
        %v887 = vadd.f32 0.0, %v886
        %v888 = vpop.f32.mrf.mxu0
        %v889 = vpop.f32.mrf.mxu0
        %v890 = vadd.f32 0.0, %v889
        %v891 = vpop.f32.mrf.mxu0
        %892 = vmatprep.mubr.bf16.mxu0 0
        %893 = vmatmul.mubr.bf16.gmra.mxu0 %v648
        %v894 = vpop.f32.mrf.mxu0
        %v895 = vadd.f32 0.0, %v894
        %v896 = vpop.f32.mrf.mxu0
        %v897 = vpop.f32.mrf.mxu0
        %v898 = vadd.f32 0.0, %v897
        %v899 = vpop.f32.mrf.mxu0
        %900 = vmatprep.mubr.bf16.mxu0 0
        %901 = vmatmul.mubr.bf16.gmra.mxu0 %v651
        %v902 = vpop.f32.mrf.mxu0
        %v903 = vadd.f32 0.0, %v902
        %v904 = vpop.f32.mrf.mxu0
        %v905 = vpop.f32.mrf.mxu0
        %v906 = vadd.f32 0.0, %v905
        %v907 = vpop.f32.mrf.mxu0
        %908 = vmatprep.mubr.bf16.mxu0 0
        %909 = vmatmul.mubr.bf16.gmra.mxu0 %v654
        %v910 = vpop.f32.mrf.mxu0
        %v911 = vadd.f32 0.0, %v910
        %v912 = vpop.f32.mrf.mxu0
        %v913 = vpop.f32.mrf.mxu0
        %v914 = vadd.f32 0.0, %v913
        %v915 = vpop.f32.mrf.mxu0
        %916 = vmatprep.mubr.bf16.mxu0 0
        %917 = vmatmul.mubr.bf16.gmra.mxu0 %v657
        %v918 = vpop.f32.mrf.mxu0
        %v919 = vadd.f32 0.0, %v918
        %v920 = vpop.f32.mrf.mxu0
        %v921 = vpop.f32.mrf.mxu0
        %v922 = vadd.f32 0.0, %v921
        %v923 = vpop.f32.mrf.mxu0
        %924 = vmatprep.mubr.bf16.mxu0 0
        %925 = vmatmul.mubr.bf16.gmra.mxu0 %v660
        %v926 = vpop.f32.mrf.mxu0
        %v927 = vadd.f32 0.0, %v926
        %v928 = vpop.f32.mrf.mxu0
        %v929 = vpop.f32.mrf.mxu0
        %v930 = vadd.f32 0.0, %v929
        %v931 = vpop.f32.mrf.mxu0
        %932 = vmatprep.mubr.bf16.mxu0 0
        %933 = vmatmul.mubr.bf16.gmra.mxu0 %v663
        %v934 = vpop.f32.mrf.mxu0
        %v935 = vadd.f32 0.0, %v934
        %v936 = vpop.f32.mrf.mxu0
        %v937 = vpop.f32.mrf.mxu0
        %v938 = vadd.f32 0.0, %v937
        %v939 = vpop.f32.mrf.mxu0
        %940 = vmatprep.mubr.bf16.mxu0 0
        %941 = vmatmul.mubr.bf16.gmra.mxu0 %v666
        %v942 = vpop.f32.mrf.mxu0
        %v943 = vadd.f32 0.0, %v942
        %v944 = vpop.f32.mrf.mxu0
        %v945 = vpop.f32.mrf.mxu0
        %v946 = vadd.f32 0.0, %v945
        %v947 = vpop.f32.mrf.mxu0
        %948 = vmatprep.mubr.bf16.mxu0 0
        %949 = vmatmul.mubr.bf16.gmra.mxu0 %v669
        %v950 = vpop.f32.mrf.mxu0
        %v951 = vadd.f32 0.0, %v950
        %v952 = vpop.f32.mrf.mxu0
        %v953 = vpop.f32.mrf.mxu0
        %v954 = vadd.f32 0.0, %v953
        %v955 = vpop.f32.mrf.mxu0
        %956 = vmatprep.mubr.bf16.mxu0 0
        %957 = vmatmul.mubr.bf16.gmra.mxu0 %v672
        %v958 = vpop.f32.mrf.mxu0
        %v959 = vadd.f32 0.0, %v958
        %v960 = vpop.f32.mrf.mxu0
        %v961 = vpop.f32.mrf.mxu0
        %v962 = vadd.f32 0.0, %v961
        %v963 = vpop.f32.mrf.mxu0
        %964 = vmatprep.mubr.bf16.mxu0 0
        %965 = vmatmul.mubr.bf16.gmra.mxu0 %v675
        %v966 = vpop.f32.mrf.mxu0
        %v967 = vadd.f32 0.0, %v966
        %v968 = vpop.f32.mrf.mxu0
        %v969 = vpop.f32.mrf.mxu0
        %v970 = vadd.f32 0.0, %v969
        %v971 = vpop.f32.mrf.mxu0
        %972 = vdwg.mxu0
        %v1037 = vunpack.c.l.b16 %v289
        %v1038 = vunpack.c.l.b16 %v290
        %v1039 = vunpack.c.l.b16 %v291
        %v1040 = vunpack.c.l.b16 %v292
        %v1041 = vunpack.c.l.b16 %v293
        %v1042 = vunpack.c.l.b16 %v294
        %v1043 = vunpack.c.l.b16 %v295
        %v1044 = vunpack.c.l.b16 %v296
        %v1045 = vunpack.c.l.b16 %v297
        %v1046 = vunpack.c.l.b16 %v298
        %v1047 = vunpack.c.l.b16 %v299
        %v1048 = vunpack.c.l.b16 %v300
        %v1049 = vunpack.c.l.b16 %v301
        %v1050 = vunpack.c.l.b16 %v302
        %v1051 = vunpack.c.l.b16 %v303
        %v1052 = vunpack.c.l.b16 %v304
        %v1053 = vunpack.c.l.b16 %v305
        %v1054 = vunpack.c.l.b16 %v306
        %v1055 = vunpack.c.l.b16 %v307
        %v1056 = vunpack.c.l.b16 %v308
        %v1057 = vunpack.c.l.b16 %v309
        %v1058 = vunpack.c.l.b16 %v310
        %v1059 = vunpack.c.l.b16 %v311
        %v1060 = vunpack.c.l.b16 %v312
        %v1061 = vunpack.c.l.b16 %v313
        %v1062 = vunpack.c.l.b16 %v314
        %v1063 = vunpack.c.l.b16 %v315
        %v1064 = vunpack.c.l.b16 %v316
        %v1065 = vunpack.c.l.b16 %v317
        %v1066 = vunpack.c.l.b16 %v318
        %v1067 = vunpack.c.l.b16 %v319
        %v1068 = vunpack.c.l.b16 %v320
        %v1069 = vunpack.c.l.b16 %v321
        %v1070 = vunpack.c.l.b16 %v322
        %v1071 = vunpack.c.l.b16 %v323
        %v1072 = vunpack.c.l.b16 %v324
        %v1073 = vunpack.c.l.b16 %v325
        %v1074 = vunpack.c.l.b16 %v326
        %v1075 = vunpack.c.l.b16 %v327
        %v1076 = vunpack.c.l.b16 %v328
        %v1077 = vunpack.c.l.b16 %v329
        %v1078 = vunpack.c.l.b16 %v330
        %v1079 = vunpack.c.l.b16 %v331
        %v1080 = vunpack.c.l.b16 %v332
        %v1081 = vunpack.c.l.b16 %v333
        %v1082 = vunpack.c.l.b16 %v334
        %v1083 = vunpack.c.l.b16 %v335
        %v1084 = vunpack.c.l.b16 %v336
        %v1085 = vunpack.c.l.b16 %v337
        %v1086 = vunpack.c.l.b16 %v338
        %v1087 = vunpack.c.l.b16 %v339
        %v1088 = vunpack.c.l.b16 %v340
        %v1089 = vunpack.c.l.b16 %v341
        %v1090 = vunpack.c.l.b16 %v342
        %v1091 = vunpack.c.l.b16 %v343
        %v1092 = vunpack.c.l.b16 %v344
        %v1093 = vunpack.c.l.b16 %v345
        %v1094 = vunpack.c.l.b16 %v346
        %v1095 = vunpack.c.l.b16 %v347
        %v1096 = vunpack.c.l.b16 %v348
        %v1097 = vunpack.c.l.b16 %v349
        %v1098 = vunpack.c.l.b16 %v350
        %v1099 = vunpack.c.l.b16 %v351
        %v1100 = vunpack.c.l.b16 %v352
        %v1101 = vpack.c.b16 %v1038, %v1037
        %v1102 = vpack.c.b16 %v1040, %v1039
        %v1103 = vpack.c.b16 %v1042, %v1041
        %v1104 = vpack.c.b16 %v1044, %v1043
        %v1105 = vpack.c.b16 %v1046, %v1045
        %v1106 = vpack.c.b16 %v1048, %v1047
        %v1107 = vpack.c.b16 %v1050, %v1049
        %v1108 = vpack.c.b16 %v1052, %v1051
        %v1109 = vpack.c.b16 %v1054, %v1053
        %v1110 = vpack.c.b16 %v1056, %v1055
        %v1111 = vpack.c.b16 %v1058, %v1057
        %v1112 = vpack.c.b16 %v1060, %v1059
        %v1113 = vpack.c.b16 %v1062, %v1061
        %v1114 = vpack.c.b16 %v1064, %v1063
        %v1115 = vpack.c.b16 %v1066, %v1065
        %v1116 = vpack.c.b16 %v1068, %v1067
        %v1117 = vpack.c.b16 %v1070, %v1069
        %v1118 = vpack.c.b16 %v1072, %v1071
        %v1119 = vpack.c.b16 %v1074, %v1073
        %v1120 = vpack.c.b16 %v1076, %v1075
        %v1121 = vpack.c.b16 %v1078, %v1077
        %v1122 = vpack.c.b16 %v1080, %v1079
        %v1123 = vpack.c.b16 %v1082, %v1081
        %v1124 = vpack.c.b16 %v1084, %v1083
        %v1125 = vpack.c.b16 %v1086, %v1085
        %v1126 = vpack.c.b16 %v1088, %v1087
        %v1127 = vpack.c.b16 %v1090, %v1089
        %v1128 = vpack.c.b16 %v1092, %v1091
        %v1129 = vpack.c.b16 %v1094, %v1093
        %v1130 = vpack.c.b16 %v1096, %v1095
        %v1131 = vpack.c.b16 %v1098, %v1097
        %v1132 = vpack.c.b16 %v1100, %v1099
        %v1135 = vunpack.c.l.b16 %v353
        %v1136 = vunpack.c.l.b16 %v354
        %v1137 = vpack.c.b16 %v1136, %v1135
        %vm1139 = vcmask 130048
        %v1141 = vsel %vm1139, %v1101, 0
        %v1144 = vsel %vm1139, %v1102, 0
        %v1147 = vsel %vm1139, %v1103, 0
        %v1150 = vsel %vm1139, %v1104, 0
        %v1153 = vsel %vm1139, %v1105, 0
        %v1156 = vsel %vm1139, %v1106, 0
        %v1159 = vsel %vm1139, %v1107, 0
        %v1162 = vsel %vm1139, %v1108, 0
        %v1165 = vsel %vm1139, %v1109, 0
        %v1168 = vsel %vm1139, %v1110, 0
        %v1171 = vsel %vm1139, %v1111, 0
        %v1174 = vsel %vm1139, %v1112, 0
        %v1177 = vsel %vm1139, %v1113, 0
        %v1180 = vsel %vm1139, %v1114, 0
        %v1183 = vsel %vm1139, %v1115, 0
        %v1186 = vsel %vm1139, %v1116, 0
        %v1189 = vsel %vm1139, %v1117, 0
        %v1192 = vsel %vm1139, %v1118, 0
        %v1195 = vsel %vm1139, %v1119, 0
        %v1198 = vsel %vm1139, %v1120, 0
        %v1201 = vsel %vm1139, %v1121, 0
        %v1204 = vsel %vm1139, %v1122, 0
        %v1207 = vsel %vm1139, %v1123, 0
        %v1210 = vsel %vm1139, %v1124, 0
        %v1213 = vsel %vm1139, %v1125, 0
        %v1216 = vsel %vm1139, %v1126, 0
        %v1219 = vsel %vm1139, %v1127, 0
        %v1222 = vsel %vm1139, %v1128, 0
        %v1225 = vsel %vm1139, %v1129, 0
        %v1228 = vsel %vm1139, %v1130, 0
        %v1231 = vsel %vm1139, %v1131, 0
        %v1234 = vsel %vm1139, %v1132, 0
        %1236 = vmatprep.subr.bf16.mxu0 0
        %1237 = vmatpush1.bf16.msra.mxu0 0
        %1238 = vmatprep.subr.bf16.mxu0 0
        %1239 = vmatpush1.bf16.msra.mxu0 0
        %1240 = vmatprep.subr.bf16.mxu0 0
        %1241 = vmatpush1.bf16.msra.mxu0 0
        %1242 = vmatprep.subr.bf16.mxu0 0
        %1243 = vmatpush1.bf16.msra.mxu0 0
        %1244 = vmatprep.subr.bf16.mxu0 0
        %1245 = vmatpush1.bf16.msra.mxu0 0
        %1246 = vmatprep.subr.bf16.mxu0 0
        %1247 = vmatpush1.bf16.msra.mxu0 0
        %1248 = vmatprep.subr.bf16.mxu0 0
        %1249 = vmatpush1.bf16.msra.mxu0 0
        %1250 = vmatprep.subr.bf16.mxu0 0
        %1251 = vmatpush1.bf16.msra.mxu0 %v1137
        %1252 = vmatprep.subr.bf16.mxu0 0
        %1253 = vmatpush2.bf16.msra.mxu0 0
        %1254 = vmatprep.subr.bf16.mxu0 0
        %1255 = vmatpush2.bf16.msra.mxu0 0
        %1256 = vmatprep.subr.bf16.mxu0 0
        %1257 = vmatpush2.bf16.msra.mxu0 0
        %1258 = vmatprep.subr.bf16.mxu0 0
        %1259 = vmatpush2.bf16.msra.mxu0 0
        %1260 = vmatprep.subr.bf16.mxu0 0
        %1261 = vmatpush2.bf16.msra.mxu0 0
        %1262 = vmatprep.subr.bf16.mxu0 0
        %1263 = vmatpush2.bf16.msra.mxu0 0
        %1264 = vmatprep.subr.bf16.mxu0 0
        %1265 = vmatpush2.bf16.msra.mxu0 0
        %1266 = vmatprep.subr.bf16.mxu0 0
        %1267 = vmatpush2.bf16.msra.mxu0 0
        %1268 = vmatprep.mubr.bf16.mxu0 0
        %1269 = vmatmul.mubr.bf16.gmra.mxu0 %v1141
        %v1270 = vpop.f32.mrf.mxu0
        %v1271 = vadd.f32 %v719, %v1270
        %v1272 = vpop.f32.mrf.mxu0
        %v1273 = vpop.f32.mrf.mxu0
        %v1274 = vadd.f32 %v722, %v1273
        %v1275 = vpop.f32.mrf.mxu0
        %1276 = vmatprep.mubr.bf16.mxu0 0
        %1277 = vmatmul.mubr.bf16.gmra.mxu0 %v1144
        %v1278 = vpop.f32.mrf.mxu0
        %v1279 = vadd.f32 %v727, %v1278
        %v1280 = vpop.f32.mrf.mxu0
        %v1281 = vpop.f32.mrf.mxu0
        %v1282 = vadd.f32 %v730, %v1281
        %v1283 = vpop.f32.mrf.mxu0
        %1284 = vmatprep.mubr.bf16.mxu0 0
        %1285 = vmatmul.mubr.bf16.gmra.mxu0 %v1147
        %v1286 = vpop.f32.mrf.mxu0
        %v1287 = vadd.f32 %v735, %v1286
        %v1288 = vpop.f32.mrf.mxu0
        %v1289 = vpop.f32.mrf.mxu0
        %v1290 = vadd.f32 %v738, %v1289
        %v1291 = vpop.f32.mrf.mxu0
        %1292 = vmatprep.mubr.bf16.mxu0 0
        %1293 = vmatmul.mubr.bf16.gmra.mxu0 %v1150
        %v1294 = vpop.f32.mrf.mxu0
        %v1295 = vadd.f32 %v743, %v1294
        %v1296 = vpop.f32.mrf.mxu0
        %v1297 = vpop.f32.mrf.mxu0
        %v1298 = vadd.f32 %v746, %v1297
        %v1299 = vpop.f32.mrf.mxu0
        %1300 = vmatprep.mubr.bf16.mxu0 0
        %1301 = vmatmul.mubr.bf16.gmra.mxu0 %v1153
        %v1302 = vpop.f32.mrf.mxu0
        %v1303 = vadd.f32 %v751, %v1302
        %v1304 = vpop.f32.mrf.mxu0
        %v1305 = vpop.f32.mrf.mxu0
        %v1306 = vadd.f32 %v754, %v1305
        %v1307 = vpop.f32.mrf.mxu0
        %1308 = vmatprep.mubr.bf16.mxu0 0
        %1309 = vmatmul.mubr.bf16.gmra.mxu0 %v1156
        %v1310 = vpop.f32.mrf.mxu0
        %v1311 = vadd.f32 %v759, %v1310
        %v1312 = vpop.f32.mrf.mxu0
        %v1313 = vpop.f32.mrf.mxu0
        %v1314 = vadd.f32 %v762, %v1313
        %v1315 = vpop.f32.mrf.mxu0
        %1316 = vmatprep.mubr.bf16.mxu0 0
        %1317 = vmatmul.mubr.bf16.gmra.mxu0 %v1159
        %v1318 = vpop.f32.mrf.mxu0
        %v1319 = vadd.f32 %v767, %v1318
        %v1320 = vpop.f32.mrf.mxu0
        %v1321 = vpop.f32.mrf.mxu0
        %v1322 = vadd.f32 %v770, %v1321
        %v1323 = vpop.f32.mrf.mxu0
        %1324 = vmatprep.mubr.bf16.mxu0 0
        %1325 = vmatmul.mubr.bf16.gmra.mxu0 %v1162
        %v1326 = vpop.f32.mrf.mxu0
        %v1327 = vadd.f32 %v775, %v1326
        %v1328 = vpop.f32.mrf.mxu0
        %v1329 = vpop.f32.mrf.mxu0
        %v1330 = vadd.f32 %v778, %v1329
        %v1331 = vpop.f32.mrf.mxu0
        %1332 = vmatprep.mubr.bf16.mxu0 0
        %1333 = vmatmul.mubr.bf16.gmra.mxu0 %v1165
        %v1334 = vpop.f32.mrf.mxu0
        %v1335 = vadd.f32 %v783, %v1334
        %v1336 = vpop.f32.mrf.mxu0
        %v1337 = vpop.f32.mrf.mxu0
        %v1338 = vadd.f32 %v786, %v1337
        %v1339 = vpop.f32.mrf.mxu0
        %1340 = vmatprep.mubr.bf16.mxu0 0
        %1341 = vmatmul.mubr.bf16.gmra.mxu0 %v1168
        %v1342 = vpop.f32.mrf.mxu0
        %v1343 = vadd.f32 %v791, %v1342
        %v1344 = vpop.f32.mrf.mxu0
        %v1345 = vpop.f32.mrf.mxu0
        %v1346 = vadd.f32 %v794, %v1345
        %v1347 = vpop.f32.mrf.mxu0
        %1348 = vmatprep.mubr.bf16.mxu0 0
        %1349 = vmatmul.mubr.bf16.gmra.mxu0 %v1171
        %v1350 = vpop.f32.mrf.mxu0
        %v1351 = vadd.f32 %v799, %v1350
        %v1352 = vpop.f32.mrf.mxu0
        %v1353 = vpop.f32.mrf.mxu0
        %v1354 = vadd.f32 %v802, %v1353
        %v1355 = vpop.f32.mrf.mxu0
        %1356 = vmatprep.mubr.bf16.mxu0 0
        %1357 = vmatmul.mubr.bf16.gmra.mxu0 %v1174
        %v1358 = vpop.f32.mrf.mxu0
        %v1359 = vadd.f32 %v807, %v1358
        %v1360 = vpop.f32.mrf.mxu0
        %v1361 = vpop.f32.mrf.mxu0
        %v1362 = vadd.f32 %v810, %v1361
        %v1363 = vpop.f32.mrf.mxu0
        %1364 = vmatprep.mubr.bf16.mxu0 0
        %1365 = vmatmul.mubr.bf16.gmra.mxu0 %v1177
        %v1366 = vpop.f32.mrf.mxu0
        %v1367 = vadd.f32 %v815, %v1366
        %v1368 = vpop.f32.mrf.mxu0
        %v1369 = vpop.f32.mrf.mxu0
        %v1370 = vadd.f32 %v818, %v1369
        %v1371 = vpop.f32.mrf.mxu0
        %1372 = vmatprep.mubr.bf16.mxu0 0
        %1373 = vmatmul.mubr.bf16.gmra.mxu0 %v1180
        %v1374 = vpop.f32.mrf.mxu0
        %v1375 = vadd.f32 %v823, %v1374
        %v1376 = vpop.f32.mrf.mxu0
        %v1377 = vpop.f32.mrf.mxu0
        %v1378 = vadd.f32 %v826, %v1377
        %v1379 = vpop.f32.mrf.mxu0
        %1380 = vmatprep.mubr.bf16.mxu0 0
        %1381 = vmatmul.mubr.bf16.gmra.mxu0 %v1183
        %v1382 = vpop.f32.mrf.mxu0
        %v1383 = vadd.f32 %v831, %v1382
        %v1384 = vpop.f32.mrf.mxu0
        %v1385 = vpop.f32.mrf.mxu0
        %v1386 = vadd.f32 %v834, %v1385
        %v1387 = vpop.f32.mrf.mxu0
        %1388 = vmatprep.mubr.bf16.mxu0 0
        %1389 = vmatmul.mubr.bf16.gmra.mxu0 %v1186
        %v1390 = vpop.f32.mrf.mxu0
        %v1391 = vadd.f32 %v839, %v1390
        %v1392 = vpop.f32.mrf.mxu0
        %v1393 = vpop.f32.mrf.mxu0
        %v1394 = vadd.f32 %v842, %v1393
        %v1395 = vpop.f32.mrf.mxu0
        %1396 = vmatprep.mubr.bf16.mxu0 0
        %1397 = vmatmul.mubr.bf16.gmra.mxu0 %v1189
        %v1398 = vpop.f32.mrf.mxu0
        %v1399 = vadd.f32 %v847, %v1398
        %v1400 = vpop.f32.mrf.mxu0
        %v1401 = vpop.f32.mrf.mxu0
        %v1402 = vadd.f32 %v850, %v1401
        %v1403 = vpop.f32.mrf.mxu0
        %1404 = vmatprep.mubr.bf16.mxu0 0
        %1405 = vmatmul.mubr.bf16.gmra.mxu0 %v1192
        %v1406 = vpop.f32.mrf.mxu0
        %v1407 = vadd.f32 %v855, %v1406
        %v1408 = vpop.f32.mrf.mxu0
        %v1409 = vpop.f32.mrf.mxu0
        %v1410 = vadd.f32 %v858, %v1409
        %v1411 = vpop.f32.mrf.mxu0
        %1412 = vmatprep.mubr.bf16.mxu0 0
        %1413 = vmatmul.mubr.bf16.gmra.mxu0 %v1195
        %v1414 = vpop.f32.mrf.mxu0
        %v1415 = vadd.f32 %v863, %v1414
        %v1416 = vpop.f32.mrf.mxu0
        %v1417 = vpop.f32.mrf.mxu0
        %v1418 = vadd.f32 %v866, %v1417
        %v1419 = vpop.f32.mrf.mxu0
        %1420 = vmatprep.mubr.bf16.mxu0 0
        %1421 = vmatmul.mubr.bf16.gmra.mxu0 %v1198
        %v1422 = vpop.f32.mrf.mxu0
        %v1423 = vadd.f32 %v871, %v1422
        %v1424 = vpop.f32.mrf.mxu0
        %v1425 = vpop.f32.mrf.mxu0
        %v1426 = vadd.f32 %v874, %v1425
        %v1427 = vpop.f32.mrf.mxu0
        %1428 = vmatprep.mubr.bf16.mxu0 0
        %1429 = vmatmul.mubr.bf16.gmra.mxu0 %v1201
        %v1430 = vpop.f32.mrf.mxu0
        %v1431 = vadd.f32 %v879, %v1430
        %v1432 = vpop.f32.mrf.mxu0
        %v1433 = vpop.f32.mrf.mxu0
        %v1434 = vadd.f32 %v882, %v1433
        %v1435 = vpop.f32.mrf.mxu0
        %1436 = vmatprep.mubr.bf16.mxu0 0
        %1437 = vmatmul.mubr.bf16.gmra.mxu0 %v1204
        %v1438 = vpop.f32.mrf.mxu0
        %v1439 = vadd.f32 %v887, %v1438
        %v1440 = vpop.f32.mrf.mxu0
        %v1441 = vpop.f32.mrf.mxu0
        %v1442 = vadd.f32 %v890, %v1441
        %v1443 = vpop.f32.mrf.mxu0
        %1444 = vmatprep.mubr.bf16.mxu0 0
        %1445 = vmatmul.mubr.bf16.gmra.mxu0 %v1207
        %v1446 = vpop.f32.mrf.mxu0
        %v1447 = vadd.f32 %v895, %v1446
        %v1448 = vpop.f32.mrf.mxu0
        %v1449 = vpop.f32.mrf.mxu0
        %v1450 = vadd.f32 %v898, %v1449
        %v1451 = vpop.f32.mrf.mxu0
        %1452 = vmatprep.mubr.bf16.mxu0 0
        %1453 = vmatmul.mubr.bf16.gmra.mxu0 %v1210
        %v1454 = vpop.f32.mrf.mxu0
        %v1455 = vadd.f32 %v903, %v1454
        %v1456 = vpop.f32.mrf.mxu0
        %v1457 = vpop.f32.mrf.mxu0
        %v1458 = vadd.f32 %v906, %v1457
        %v1459 = vpop.f32.mrf.mxu0
        %1460 = vmatprep.mubr.bf16.mxu0 0
        %1461 = vmatmul.mubr.bf16.gmra.mxu0 %v1213
        %v1462 = vpop.f32.mrf.mxu0
        %v1463 = vadd.f32 %v911, %v1462
        %v1464 = vpop.f32.mrf.mxu0
        %v1465 = vpop.f32.mrf.mxu0
        %v1466 = vadd.f32 %v914, %v1465
        %v1467 = vpop.f32.mrf.mxu0
        %1468 = vmatprep.mubr.bf16.mxu0 0
        %1469 = vmatmul.mubr.bf16.gmra.mxu0 %v1216
        %v1470 = vpop.f32.mrf.mxu0
        %v1471 = vadd.f32 %v919, %v1470
        %v1472 = vpop.f32.mrf.mxu0
        %v1473 = vpop.f32.mrf.mxu0
        %v1474 = vadd.f32 %v922, %v1473
        %v1475 = vpop.f32.mrf.mxu0
        %1476 = vmatprep.mubr.bf16.mxu0 0
        %1477 = vmatmul.mubr.bf16.gmra.mxu0 %v1219
        %v1478 = vpop.f32.mrf.mxu0
        %v1479 = vadd.f32 %v927, %v1478
        %v1480 = vpop.f32.mrf.mxu0
        %v1481 = vpop.f32.mrf.mxu0
        %v1482 = vadd.f32 %v930, %v1481
        %v1483 = vpop.f32.mrf.mxu0
        %1484 = vmatprep.mubr.bf16.mxu0 0
        %1485 = vmatmul.mubr.bf16.gmra.mxu0 %v1222
        %v1486 = vpop.f32.mrf.mxu0
        %v1487 = vadd.f32 %v935, %v1486
        %v1488 = vpop.f32.mrf.mxu0
        %v1489 = vpop.f32.mrf.mxu0
        %v1490 = vadd.f32 %v938, %v1489
        %v1491 = vpop.f32.mrf.mxu0
        %1492 = vmatprep.mubr.bf16.mxu0 0
        %1493 = vmatmul.mubr.bf16.gmra.mxu0 %v1225
        %v1494 = vpop.f32.mrf.mxu0
        %v1495 = vadd.f32 %v943, %v1494
        %v1496 = vpop.f32.mrf.mxu0
        %v1497 = vpop.f32.mrf.mxu0
        %v1498 = vadd.f32 %v946, %v1497
        %v1499 = vpop.f32.mrf.mxu0
        %1500 = vmatprep.mubr.bf16.mxu0 0
        %1501 = vmatmul.mubr.bf16.gmra.mxu0 %v1228
        %v1502 = vpop.f32.mrf.mxu0
        %v1503 = vadd.f32 %v951, %v1502
        %v1504 = vpop.f32.mrf.mxu0
        %v1505 = vpop.f32.mrf.mxu0
        %v1506 = vadd.f32 %v954, %v1505
        %v1507 = vpop.f32.mrf.mxu0
        %1508 = vmatprep.mubr.bf16.mxu0 0
        %1509 = vmatmul.mubr.bf16.gmra.mxu0 %v1231
        %v1510 = vpop.f32.mrf.mxu0
        %v1511 = vadd.f32 %v959, %v1510
        %v1512 = vpop.f32.mrf.mxu0
        %v1513 = vpop.f32.mrf.mxu0
        %v1514 = vadd.f32 %v962, %v1513
        %v1515 = vpop.f32.mrf.mxu0
        %1516 = vmatprep.mubr.bf16.mxu0 0
        %1517 = vmatmul.mubr.bf16.gmra.mxu0 %v1234
        %v1518 = vpop.f32.mrf.mxu0
        %v1519 = vadd.f32 %v967, %v1518
        %v1520 = vpop.f32.mrf.mxu0
        %v1521 = vpop.f32.mrf.mxu0
        %v1522 = vadd.f32 %v970, %v1521
        %v1523 = vpop.f32.mrf.mxu0
        %1524 = vdwg.mxu0
        %v1525 = vld [vmem:[%s4] sm:$0x1]
        %v1527 = vlaneseq
        %v1528 = vshrl.u32 %v1527, 7
        %v1529 = vsub.s32 0, %v1528
        %v1530 = vrot.slane %v1525, %v1529
        %v1532 = vadd.f32 %v1271, %v1530
        %v1533 = vadd.f32 %v1274, %v1530
        %v1534 = vadd.f32 %v1279, %v1530
        %v1535 = vadd.f32 %v1282, %v1530
        %v1536 = vadd.f32 %v1287, %v1530
        %v1537 = vadd.f32 %v1290, %v1530
        %v1538 = vadd.f32 %v1295, %v1530
        %v1539 = vadd.f32 %v1298, %v1530
        %v1540 = vadd.f32 %v1303, %v1530
        %v1541 = vadd.f32 %v1306, %v1530
        %v1542 = vadd.f32 %v1311, %v1530
        %v1543 = vadd.f32 %v1314, %v1530
        %v1544 = vadd.f32 %v1319, %v1530
        %v1545 = vadd.f32 %v1322, %v1530
        %v1546 = vadd.f32 %v1327, %v1530
        %v1547 = vadd.f32 %v1330, %v1530
        %v1548 = vadd.f32 %v1335, %v1530
        %v1549 = vadd.f32 %v1338, %v1530
        %v1550 = vadd.f32 %v1343, %v1530
        %v1551 = vadd.f32 %v1346, %v1530
        %v1552 = vadd.f32 %v1351, %v1530
        %v1553 = vadd.f32 %v1354, %v1530
        %v1554 = vadd.f32 %v1359, %v1530
        %v1555 = vadd.f32 %v1362, %v1530
        %v1556 = vadd.f32 %v1367, %v1530
        %v1557 = vadd.f32 %v1370, %v1530
        %v1558 = vadd.f32 %v1375, %v1530
        %v1559 = vadd.f32 %v1378, %v1530
        %v1560 = vadd.f32 %v1383, %v1530
        %v1561 = vadd.f32 %v1386, %v1530
        %v1562 = vadd.f32 %v1391, %v1530
        %v1563 = vadd.f32 %v1394, %v1530
        %v1564 = vadd.f32 %v1399, %v1530
        %v1565 = vadd.f32 %v1402, %v1530
        %v1566 = vadd.f32 %v1407, %v1530
        %v1567 = vadd.f32 %v1410, %v1530
        %v1568 = vadd.f32 %v1415, %v1530
        %v1569 = vadd.f32 %v1418, %v1530
        %v1570 = vadd.f32 %v1423, %v1530
        %v1571 = vadd.f32 %v1426, %v1530
        %v1572 = vadd.f32 %v1431, %v1530
        %v1573 = vadd.f32 %v1434, %v1530
        %v1574 = vadd.f32 %v1439, %v1530
        %v1575 = vadd.f32 %v1442, %v1530
        %v1576 = vadd.f32 %v1447, %v1530
        %v1577 = vadd.f32 %v1450, %v1530
        %v1578 = vadd.f32 %v1455, %v1530
        %v1579 = vadd.f32 %v1458, %v1530
        %v1580 = vadd.f32 %v1463, %v1530
        %v1581 = vadd.f32 %v1466, %v1530
        %v1582 = vadd.f32 %v1471, %v1530
        %v1583 = vadd.f32 %v1474, %v1530
        %v1584 = vadd.f32 %v1479, %v1530
        %v1585 = vadd.f32 %v1482, %v1530
        %v1586 = vadd.f32 %v1487, %v1530
        %v1587 = vadd.f32 %v1490, %v1530
        %v1588 = vadd.f32 %v1495, %v1530
        %v1589 = vadd.f32 %v1498, %v1530
        %v1590 = vadd.f32 %v1503, %v1530
        %v1591 = vadd.f32 %v1506, %v1530
        %v1592 = vadd.f32 %v1511, %v1530
        %v1593 = vadd.f32 %v1514, %v1530
        %v1594 = vadd.f32 %v1519, %v1530
        %v1595 = vadd.f32 %v1522, %v1530
        %v1596 = vpack.c.bf16 %v1533, %v1532
        %v1597 = vpack.c.bf16 %v1535, %v1534
        %v1598 = vpack.c.bf16 %v1537, %v1536
        %v1599 = vpack.c.bf16 %v1539, %v1538
        %v1600 = vpack.c.bf16 %v1541, %v1540
        %v1601 = vpack.c.bf16 %v1543, %v1542
        %v1602 = vpack.c.bf16 %v1545, %v1544
        %v1603 = vpack.c.bf16 %v1547, %v1546
        %v1604 = vpack.c.bf16 %v1549, %v1548
        %v1605 = vpack.c.bf16 %v1551, %v1550
        %v1606 = vpack.c.bf16 %v1553, %v1552
        %v1607 = vpack.c.bf16 %v1555, %v1554
        %v1608 = vpack.c.bf16 %v1557, %v1556
        %v1609 = vpack.c.bf16 %v1559, %v1558
        %v1610 = vpack.c.bf16 %v1561, %v1560
        %v1611 = vpack.c.bf16 %v1563, %v1562
        %v1612 = vpack.c.bf16 %v1565, %v1564
        %v1613 = vpack.c.bf16 %v1567, %v1566
        %v1614 = vpack.c.bf16 %v1569, %v1568
        %v1615 = vpack.c.bf16 %v1571, %v1570
        %v1616 = vpack.c.bf16 %v1573, %v1572
        %v1617 = vpack.c.bf16 %v1575, %v1574
        %v1618 = vpack.c.bf16 %v1577, %v1576
        %v1619 = vpack.c.bf16 %v1579, %v1578
        %v1620 = vpack.c.bf16 %v1581, %v1580
        %v1621 = vpack.c.bf16 %v1583, %v1582
        %v1622 = vpack.c.bf16 %v1585, %v1584
        %v1623 = vpack.c.bf16 %v1587, %v1586
        %v1624 = vpack.c.bf16 %v1589, %v1588
        %v1625 = vpack.c.bf16 %v1591, %v1590
        %v1626 = vpack.c.bf16 %v1593, %v1592
        %v1627 = vpack.c.bf16 %v1595, %v1594
        %v1660 = vunpack.c.l.b16 %v1596
        %v1661 = vunpack.c.h.b16 %v1596
        %v1662 = vunpack.c.l.b16 %v1597
        %v1663 = vunpack.c.h.b16 %v1597
        %v1664 = vunpack.c.l.b16 %v1598
        %v1665 = vunpack.c.h.b16 %v1598
        %v1666 = vunpack.c.l.b16 %v1599
        %v1667 = vunpack.c.h.b16 %v1599
        %v1668 = vunpack.c.l.b16 %v1600
        %v1669 = vunpack.c.h.b16 %v1600
        %v1670 = vunpack.c.l.b16 %v1601
        %v1671 = vunpack.c.h.b16 %v1601
        %v1672 = vunpack.c.l.b16 %v1602
        %v1673 = vunpack.c.h.b16 %v1602
        %v1674 = vunpack.c.l.b16 %v1603
        %v1675 = vunpack.c.h.b16 %v1603
        %v1676 = vunpack.c.l.b16 %v1604
        %v1677 = vunpack.c.h.b16 %v1604
        %v1678 = vunpack.c.l.b16 %v1605
        %v1679 = vunpack.c.h.b16 %v1605
        %v1680 = vunpack.c.l.b16 %v1606
        %v1681 = vunpack.c.h.b16 %v1606
        %v1682 = vunpack.c.l.b16 %v1607
        %v1683 = vunpack.c.h.b16 %v1607
        %v1684 = vunpack.c.l.b16 %v1608
        %v1685 = vunpack.c.h.b16 %v1608
        %v1686 = vunpack.c.l.b16 %v1609
        %v1687 = vunpack.c.h.b16 %v1609
        %v1688 = vunpack.c.l.b16 %v1610
        %v1689 = vunpack.c.h.b16 %v1610
        %v1690 = vunpack.c.l.b16 %v1611
        %v1691 = vunpack.c.h.b16 %v1611
        %v1692 = vunpack.c.l.b16 %v1612
        %v1693 = vunpack.c.h.b16 %v1612
        %v1694 = vunpack.c.l.b16 %v1613
        %v1695 = vunpack.c.h.b16 %v1613
        %v1696 = vunpack.c.l.b16 %v1614
        %v1697 = vunpack.c.h.b16 %v1614
        %v1698 = vunpack.c.l.b16 %v1615
        %v1699 = vunpack.c.h.b16 %v1615
        %v1700 = vunpack.c.l.b16 %v1616
        %v1701 = vunpack.c.h.b16 %v1616
        %v1702 = vunpack.c.l.b16 %v1617
        %v1703 = vunpack.c.h.b16 %v1617
        %v1704 = vunpack.c.l.b16 %v1618
        %v1705 = vunpack.c.h.b16 %v1618
        %v1706 = vunpack.c.l.b16 %v1619
        %v1707 = vunpack.c.h.b16 %v1619
        %v1708 = vunpack.c.l.b16 %v1620
        %v1709 = vunpack.c.h.b16 %v1620
        %v1710 = vunpack.c.l.b16 %v1621
        %v1711 = vunpack.c.h.b16 %v1621
        %v1712 = vunpack.c.l.b16 %v1622
        %v1713 = vunpack.c.h.b16 %v1622
        %v1714 = vunpack.c.l.b16 %v1623
        %v1715 = vunpack.c.h.b16 %v1623
        %v1716 = vunpack.c.l.b16 %v1624
        %v1717 = vunpack.c.h.b16 %v1624
        %v1718 = vunpack.c.l.b16 %v1625
        %v1719 = vunpack.c.h.b16 %v1625
        %v1720 = vunpack.c.l.b16 %v1626
        %v1721 = vunpack.c.h.b16 %v1626
        %v1722 = vunpack.c.l.b16 %v1627
        %v1723 = vunpack.c.h.b16 %v1627
        %v1724 = vpack.c.b16 %v1660, %v1660
        %v1725 = vpack.c.b16 %v1661, %v1661
        %v1726 = vpack.c.b16 %v1662, %v1662
        %v1727 = vpack.c.b16 %v1663, %v1663
        %v1728 = vpack.c.b16 %v1664, %v1664
        %v1729 = vpack.c.b16 %v1665, %v1665
        %v1730 = vpack.c.b16 %v1666, %v1666
        %v1731 = vpack.c.b16 %v1667, %v1667
        %v1732 = vpack.c.b16 %v1668, %v1668
        %v1733 = vpack.c.b16 %v1669, %v1669
        %v1734 = vpack.c.b16 %v1670, %v1670
        %v1735 = vpack.c.b16 %v1671, %v1671
        %v1736 = vpack.c.b16 %v1672, %v1672
        %v1737 = vpack.c.b16 %v1673, %v1673
        %v1738 = vpack.c.b16 %v1674, %v1674
        %v1739 = vpack.c.b16 %v1675, %v1675
        %v1740 = vpack.c.b16 %v1676, %v1676
        %v1741 = vpack.c.b16 %v1677, %v1677
        %v1742 = vpack.c.b16 %v1678, %v1678
        %v1743 = vpack.c.b16 %v1679, %v1679
        %v1744 = vpack.c.b16 %v1680, %v1680
        %v1745 = vpack.c.b16 %v1681, %v1681
        %v1746 = vpack.c.b16 %v1682, %v1682
        %v1747 = vpack.c.b16 %v1683, %v1683
        %v1748 = vpack.c.b16 %v1684, %v1684
        %v1749 = vpack.c.b16 %v1685, %v1685
        %v1750 = vpack.c.b16 %v1686, %v1686
        %v1751 = vpack.c.b16 %v1687, %v1687
        %v1752 = vpack.c.b16 %v1688, %v1688
        %v1753 = vpack.c.b16 %v1689, %v1689
        %v1754 = vpack.c.b16 %v1690, %v1690
        %v1755 = vpack.c.b16 %v1691, %v1691
        %v1756 = vpack.c.b16 %v1692, %v1692
        %v1757 = vpack.c.b16 %v1693, %v1693
        %v1758 = vpack.c.b16 %v1694, %v1694
        %v1759 = vpack.c.b16 %v1695, %v1695
        %v1760 = vpack.c.b16 %v1696, %v1696
        %v1761 = vpack.c.b16 %v1697, %v1697
        %v1762 = vpack.c.b16 %v1698, %v1698
        %v1763 = vpack.c.b16 %v1699, %v1699
        %v1764 = vpack.c.b16 %v1700, %v1700
        %v1765 = vpack.c.b16 %v1701, %v1701
        %v1766 = vpack.c.b16 %v1702, %v1702
        %v1767 = vpack.c.b16 %v1703, %v1703
        %v1768 = vpack.c.b16 %v1704, %v1704
        %v1769 = vpack.c.b16 %v1705, %v1705
        %v1770 = vpack.c.b16 %v1706, %v1706
        %v1771 = vpack.c.b16 %v1707, %v1707
        %v1772 = vpack.c.b16 %v1708, %v1708
        %v1773 = vpack.c.b16 %v1709, %v1709
        %v1774 = vpack.c.b16 %v1710, %v1710
        %v1775 = vpack.c.b16 %v1711, %v1711
        %v1776 = vpack.c.b16 %v1712, %v1712
        %v1777 = vpack.c.b16 %v1713, %v1713
        %v1778 = vpack.c.b16 %v1714, %v1714
        %v1779 = vpack.c.b16 %v1715, %v1715
        %v1780 = vpack.c.b16 %v1716, %v1716
        %v1781 = vpack.c.b16 %v1717, %v1717
        %v1782 = vpack.c.b16 %v1718, %v1718
        %v1783 = vpack.c.b16 %v1719, %v1719
        %v1784 = vpack.c.b16 %v1720, %v1720
        %v1785 = vpack.c.b16 %v1721, %v1721
        %v1786 = vpack.c.b16 %v1722, %v1722
        %v1787 = vpack.c.b16 %v1723, %v1723
        %vm1852 = vcmask 257024
        %1853 = vst.msk [vmem:[%s254] sm:$0xf] %vm1852, %v1724
        %1854 = vst.msk [vmem:[%s254 + $0x4] sm:$0xf] %vm1852, %v1725
        %1855 = vst.msk [vmem:[%s254 + $0x8] sm:$0xf] %vm1852, %v1726
        %1856 = vst.msk [vmem:[%s254 + $0xc] sm:$0xf] %vm1852, %v1727
        %1857 = vst.msk [vmem:[%s254 + $0x10] sm:$0xf] %vm1852, %v1728
        %1858 = vst.msk [vmem:[%s254 + $0x14] sm:$0xf] %vm1852, %v1729
        %1859 = vst.msk [vmem:[%s254 + $0x18] sm:$0xf] %vm1852, %v1730
        %1860 = vst.msk [vmem:[%s254 + $0x1c] sm:$0xf] %vm1852, %v1731
        %1861 = vst.msk [vmem:[%s254 + $0x20] sm:$0xf] %vm1852, %v1732
        %1862 = vst.msk [vmem:[%s254 + $0x24] sm:$0xf] %vm1852, %v1733
        %1863 = vst.msk [vmem:[%s254 + $0x28] sm:$0xf] %vm1852, %v1734
        %1864 = vst.msk [vmem:[%s254 + $0x2c] sm:$0xf] %vm1852, %v1735
        %1865 = vst.msk [vmem:[%s254 + $0x30] sm:$0xf] %vm1852, %v1736
        %1866 = vst.msk [vmem:[%s254 + $0x34] sm:$0xf] %vm1852, %v1737
        %1867 = vst.msk [vmem:[%s254 + $0x38] sm:$0xf] %vm1852, %v1738
        %1868 = vst.msk [vmem:[%s254 + $0x3c] sm:$0xf] %vm1852, %v1739
        %1869 = vst.msk [vmem:[%s254 + $0x40] sm:$0xf] %vm1852, %v1740
        %1870 = vst.msk [vmem:[%s254 + $0x44] sm:$0xf] %vm1852, %v1741
        %1871 = vst.msk [vmem:[%s254 + $0x48] sm:$0xf] %vm1852, %v1742
        %1872 = vst.msk [vmem:[%s254 + $0x4c] sm:$0xf] %vm1852, %v1743
        %1873 = vst.msk [vmem:[%s254 + $0x50] sm:$0xf] %vm1852, %v1744
        %1874 = vst.msk [vmem:[%s254 + $0x54] sm:$0xf] %vm1852, %v1745
        %1875 = vst.msk [vmem:[%s254 + $0x58] sm:$0xf] %vm1852, %v1746
        %1876 = vst.msk [vmem:[%s254 + $0x5c] sm:$0xf] %vm1852, %v1747
        %1877 = vst.msk [vmem:[%s254 + $0x60] sm:$0xf] %vm1852, %v1748
        %1878 = vst.msk [vmem:[%s254 + $0x64] sm:$0xf] %vm1852, %v1749
        %1879 = vst.msk [vmem:[%s254 + $0x68] sm:$0xf] %vm1852, %v1750
        %1880 = vst.msk [vmem:[%s254 + $0x6c] sm:$0xf] %vm1852, %v1751
        %1881 = vst.msk [vmem:[%s254 + $0x70] sm:$0xf] %vm1852, %v1752
        %1882 = vst.msk [vmem:[%s254 + $0x74] sm:$0xf] %vm1852, %v1753
        %1883 = vst.msk [vmem:[%s254 + $0x78] sm:$0xf] %vm1852, %v1754
        %1884 = vst.msk [vmem:[%s254 + $0x7c] sm:$0xf] %vm1852, %v1755
        %1885 = vst.msk [vmem:[%s254 + $0x80] sm:$0xf] %vm1852, %v1756
        %1886 = vst.msk [vmem:[%s254 + $0x84] sm:$0xf] %vm1852, %v1757
        %1887 = vst.msk [vmem:[%s254 + $0x88] sm:$0xf] %vm1852, %v1758
        %1888 = vst.msk [vmem:[%s254 + $0x8c] sm:$0xf] %vm1852, %v1759
        %1889 = vst.msk [vmem:[%s254 + $0x90] sm:$0xf] %vm1852, %v1760
        %1890 = vst.msk [vmem:[%s254 + $0x94] sm:$0xf] %vm1852, %v1761
        %1891 = vst.msk [vmem:[%s254 + $0x98] sm:$0xf] %vm1852, %v1762
        %1892 = vst.msk [vmem:[%s254 + $0x9c] sm:$0xf] %vm1852, %v1763
        %1893 = vst.msk [vmem:[%s254 + $0xa0] sm:$0xf] %vm1852, %v1764
        %1894 = vst.msk [vmem:[%s254 + $0xa4] sm:$0xf] %vm1852, %v1765
        %1895 = vst.msk [vmem:[%s254 + $0xa8] sm:$0xf] %vm1852, %v1766
        %1896 = vst.msk [vmem:[%s254 + $0xac] sm:$0xf] %vm1852, %v1767
        %1897 = vst.msk [vmem:[%s254 + $0xb0] sm:$0xf] %vm1852, %v1768
        %1898 = vst.msk [vmem:[%s254 + $0xb4] sm:$0xf] %vm1852, %v1769
        %1899 = vst.msk [vmem:[%s254 + $0xb8] sm:$0xf] %vm1852, %v1770
        %1900 = vst.msk [vmem:[%s254 + $0xbc] sm:$0xf] %vm1852, %v1771
        %1901 = vst.msk [vmem:[%s254 + $0xc0] sm:$0xf] %vm1852, %v1772
        %1902 = vst.msk [vmem:[%s254 + $0xc4] sm:$0xf] %vm1852, %v1773
        %1903 = vst.msk [vmem:[%s254 + $0xc8] sm:$0xf] %vm1852, %v1774
        %1904 = vst.msk [vmem:[%s254 + $0xcc] sm:$0xf] %vm1852, %v1775
        %1905 = vst.msk [vmem:[%s254 + $0xd0] sm:$0xf] %vm1852, %v1776
        %1906 = vst.msk [vmem:[%s254 + $0xd4] sm:$0xf] %vm1852, %v1777
        %1907 = vst.msk [vmem:[%s254 + $0xd8] sm:$0xf] %vm1852, %v1778
        %1908 = vst.msk [vmem:[%s254 + $0xdc] sm:$0xf] %vm1852, %v1779
        %1909 = vst.msk [vmem:[%s254 + $0xe0] sm:$0xf] %vm1852, %v1780
        %1910 = vst.msk [vmem:[%s254 + $0xe4] sm:$0xf] %vm1852, %v1781
        %1911 = vst.msk [vmem:[%s254 + $0xe8] sm:$0xf] %vm1852, %v1782
        %1912 = vst.msk [vmem:[%s254 + $0xec] sm:$0xf] %vm1852, %v1783
        %1913 = vst.msk [vmem:[%s254 + $0xf0] sm:$0xf] %vm1852, %v1784
        %1914 = vst.msk [vmem:[%s254 + $0xf4] sm:$0xf] %vm1852, %v1785
        %1915 = vst.msk [vmem:[%s254 + $0xf8] sm:$0xf] %vm1852, %v1786
        %1916 = vst.msk [vmem:[%s254 + $0xfc] sm:$0xf] %vm1852, %v1787
        %s1917 = sand.u32 %s139, 1
        %s1918 = sand.u32 %s139, 1
        %s1919 = smul.addr %s1918, 256
        %s1920 = scalar_lea.vmem [#allocation2], %s1919
        // Predicated region
        $region41: #{tpu_custom_call.1} parent=39 // pred_check
          %p1921 = pneg %p149
        $region42: #{tpu_custom_call.1} parent=39 // pred_check_branch
          %1923 = sbr.rel (%p1921) target = $region44
        $region43: #{tpu_custom_call.1} parent=39 // pred_region
          %s1924 = smul.u32 64, %s16
          %s1925 = ssub.s32 500, %s1924
          %p1926 = scmp.lt.s32.totalorder %s1925, 64
          %s1927 = scalar_select %p1926, %s1925, 64
          %s1928 = smul.u32 64, %s1927
          %p1929 = scmp.ne.s32.totalorder 0, %s1928
          %s1930 = smul.addr %s1924, 4
          %s1931 = scalar_lea.vmem %s5, %s1930
          // Predicated region
          $region45: #{tpu_custom_call.1} parent=43 // pred_check
            %p1932 = pneg %p1929
          $region46: #{tpu_custom_call.1} parent=43 // pred_check_branch
            %1934 = sbr.rel (%p1932) target = $region48
          $region47: #{tpu_custom_call.1} parent=43 // pred_region
            // Predicated region
            $region49: #{tpu_custom_call.1} parent=47 // pred_check
              _
            $region50: #{tpu_custom_call.1} parent=47 // pred_check_branch
              %1936 = sbr.rel target = $region52
            $region51: #{tpu_custom_call.1} parent=47 // pred_region
              // Predicated region
              $region71: #{tpu_custom_call.1} parent=51 // pred_check
                _
              $region72: #{tpu_custom_call.1} parent=51 // pred_check_branch
                %2112 = sbr.rel (0) target = $region74
              $region73: #{tpu_custom_call.1} parent=51 // pred_region
                %s2114 = ssub.s32 16, 1
                %s2115 = sshrl.u32 %s1927, 6
                // While loop
                $region75: #{tpu_custom_call.1} parent=73 // loop_pre_header
                  _
                $region76: #{tpu_custom_call.1} parent=73 // loop_header
                  %s2117 = sphi 0, %s2119
                  %p2118 = scmp.ge.s32.totalorder %s2117, %s2115
                  %s2122 = sphi 0, %s2255
                  %s2123 = sphi %s1920, %s2258
                  %s2124 = sphi %s1931, %s2259
                $region77: #{tpu_custom_call.1} parent=73 // loop_header_branch
                  %2121 = sbr.rel (%p2118) target = $region81
                $region78: #{tpu_custom_call.1} parent=73 // loop_body
                  %v2125 = vld [vmem:[%s2123] sm:%s2114]
                  %2126 = vst [vmem:[%s2124] sm:%s2114] %v2125
                  %v2127 = vld [vmem:[%s2123 + $0x4] sm:%s2114]
                  %2128 = vst [vmem:[%s2124 + $0x4] sm:%s2114] %v2127
                  %v2129 = vld [vmem:[%s2123 + $0x8] sm:%s2114]
                  %2130 = vst [vmem:[%s2124 + $0x8] sm:%s2114] %v2129
                  %v2131 = vld [vmem:[%s2123 + $0xc] sm:%s2114]
                  %2132 = vst [vmem:[%s2124 + $0xc] sm:%s2114] %v2131
                  %v2133 = vld [vmem:[%s2123 + $0x10] sm:%s2114]
                  %2134 = vst [vmem:[%s2124 + $0x10] sm:%s2114] %v2133
                  %v2135 = vld [vmem:[%s2123 + $0x14] sm:%s2114]
                  %2136 = vst [vmem:[%s2124 + $0x14] sm:%s2114] %v2135
                  %v2137 = vld [vmem:[%s2123 + $0x18] sm:%s2114]
                  %2138 = vst [vmem:[%s2124 + $0x18] sm:%s2114] %v2137
                  %v2139 = vld [vmem:[%s2123 + $0x1c] sm:%s2114]
                  %2140 = vst [vmem:[%s2124 + $0x1c] sm:%s2114] %v2139
                  %v2141 = vld [vmem:[%s2123 + $0x20] sm:%s2114]
                  %2142 = vst [vmem:[%s2124 + $0x20] sm:%s2114] %v2141
                  %v2143 = vld [vmem:[%s2123 + $0x24] sm:%s2114]
                  %2144 = vst [vmem:[%s2124 + $0x24] sm:%s2114] %v2143
                  %v2145 = vld [vmem:[%s2123 + $0x28] sm:%s2114]
                  %2146 = vst [vmem:[%s2124 + $0x28] sm:%s2114] %v2145
                  %v2147 = vld [vmem:[%s2123 + $0x2c] sm:%s2114]
                  %2148 = vst [vmem:[%s2124 + $0x2c] sm:%s2114] %v2147
                  %v2149 = vld [vmem:[%s2123 + $0x30] sm:%s2114]
                  %2150 = vst [vmem:[%s2124 + $0x30] sm:%s2114] %v2149
                  %v2151 = vld [vmem:[%s2123 + $0x34] sm:%s2114]
                  %2152 = vst [vmem:[%s2124 + $0x34] sm:%s2114] %v2151
                  %v2153 = vld [vmem:[%s2123 + $0x38] sm:%s2114]
                  %2154 = vst [vmem:[%s2124 + $0x38] sm:%s2114] %v2153
                  %v2155 = vld [vmem:[%s2123 + $0x3c] sm:%s2114]
                  %2156 = vst [vmem:[%s2124 + $0x3c] sm:%s2114] %v2155
                  %v2157 = vld [vmem:[%s2123 + $0x40] sm:%s2114]
                  %2158 = vst [vmem:[%s2124 + $0x40] sm:%s2114] %v2157
                  %v2159 = vld [vmem:[%s2123 + $0x44] sm:%s2114]
                  %2160 = vst [vmem:[%s2124 + $0x44] sm:%s2114] %v2159
                  %v2161 = vld [vmem:[%s2123 + $0x48] sm:%s2114]
                  %2162 = vst [vmem:[%s2124 + $0x48] sm:%s2114] %v2161
                  %v2163 = vld [vmem:[%s2123 + $0x4c] sm:%s2114]
                  %2164 = vst [vmem:[%s2124 + $0x4c] sm:%s2114] %v2163
                  %v2165 = vld [vmem:[%s2123 + $0x50] sm:%s2114]
                  %2166 = vst [vmem:[%s2124 + $0x50] sm:%s2114] %v2165
                  %v2167 = vld [vmem:[%s2123 + $0x54] sm:%s2114]
                  %2168 = vst [vmem:[%s2124 + $0x54] sm:%s2114] %v2167
                  %v2169 = vld [vmem:[%s2123 + $0x58] sm:%s2114]
                  %2170 = vst [vmem:[%s2124 + $0x58] sm:%s2114] %v2169
                  %v2171 = vld [vmem:[%s2123 + $0x5c] sm:%s2114]
                  %2172 = vst [vmem:[%s2124 + $0x5c] sm:%s2114] %v2171
                  %v2173 = vld [vmem:[%s2123 + $0x60] sm:%s2114]
                  %2174 = vst [vmem:[%s2124 + $0x60] sm:%s2114] %v2173
                  %v2175 = vld [vmem:[%s2123 + $0x64] sm:%s2114]
                  %2176 = vst [vmem:[%s2124 + $0x64] sm:%s2114] %v2175
                  %v2177 = vld [vmem:[%s2123 + $0x68] sm:%s2114]
                  %2178 = vst [vmem:[%s2124 + $0x68] sm:%s2114] %v2177
                  %v2179 = vld [vmem:[%s2123 + $0x6c] sm:%s2114]
                  %2180 = vst [vmem:[%s2124 + $0x6c] sm:%s2114] %v2179
                  %v2181 = vld [vmem:[%s2123 + $0x70] sm:%s2114]
                  %2182 = vst [vmem:[%s2124 + $0x70] sm:%s2114] %v2181
                  %v2183 = vld [vmem:[%s2123 + $0x74] sm:%s2114]
                  %2184 = vst [vmem:[%s2124 + $0x74] sm:%s2114] %v2183
                  %v2185 = vld [vmem:[%s2123 + $0x78] sm:%s2114]
                  %2186 = vst [vmem:[%s2124 + $0x78] sm:%s2114] %v2185
                  %v2187 = vld [vmem:[%s2123 + $0x7c] sm:%s2114]
                  %2188 = vst [vmem:[%s2124 + $0x7c] sm:%s2114] %v2187
                  %v2189 = vld [vmem:[%s2123 + $0x80] sm:%s2114]
                  %2190 = vst [vmem:[%s2124 + $0x80] sm:%s2114] %v2189
                  %v2191 = vld [vmem:[%s2123 + $0x84] sm:%s2114]
                  %2192 = vst [vmem:[%s2124 + $0x84] sm:%s2114] %v2191
                  %v2193 = vld [vmem:[%s2123 + $0x88] sm:%s2114]
                  %2194 = vst [vmem:[%s2124 + $0x88] sm:%s2114] %v2193
                  %v2195 = vld [vmem:[%s2123 + $0x8c] sm:%s2114]
                  %2196 = vst [vmem:[%s2124 + $0x8c] sm:%s2114] %v2195
                  %v2197 = vld [vmem:[%s2123 + $0x90] sm:%s2114]
                  %2198 = vst [vmem:[%s2124 + $0x90] sm:%s2114] %v2197
                  %v2199 = vld [vmem:[%s2123 + $0x94] sm:%s2114]
                  %2200 = vst [vmem:[%s2124 + $0x94] sm:%s2114] %v2199
                  %v2201 = vld [vmem:[%s2123 + $0x98] sm:%s2114]
                  %2202 = vst [vmem:[%s2124 + $0x98] sm:%s2114] %v2201
                  %v2203 = vld [vmem:[%s2123 + $0x9c] sm:%s2114]
                  %2204 = vst [vmem:[%s2124 + $0x9c] sm:%s2114] %v2203
                  %v2205 = vld [vmem:[%s2123 + $0xa0] sm:%s2114]
                  %2206 = vst [vmem:[%s2124 + $0xa0] sm:%s2114] %v2205
                  %v2207 = vld [vmem:[%s2123 + $0xa4] sm:%s2114]
                  %2208 = vst [vmem:[%s2124 + $0xa4] sm:%s2114] %v2207
                  %v2209 = vld [vmem:[%s2123 + $0xa8] sm:%s2114]
                  %2210 = vst [vmem:[%s2124 + $0xa8] sm:%s2114] %v2209
                  %v2211 = vld [vmem:[%s2123 + $0xac] sm:%s2114]
                  %2212 = vst [vmem:[%s2124 + $0xac] sm:%s2114] %v2211
                  %v2213 = vld [vmem:[%s2123 + $0xb0] sm:%s2114]
                  %2214 = vst [vmem:[%s2124 + $0xb0] sm:%s2114] %v2213
                  %v2215 = vld [vmem:[%s2123 + $0xb4] sm:%s2114]
                  %2216 = vst [vmem:[%s2124 + $0xb4] sm:%s2114] %v2215
                  %v2217 = vld [vmem:[%s2123 + $0xb8] sm:%s2114]
                  %2218 = vst [vmem:[%s2124 + $0xb8] sm:%s2114] %v2217
                  %v2219 = vld [vmem:[%s2123 + $0xbc] sm:%s2114]
                  %2220 = vst [vmem:[%s2124 + $0xbc] sm:%s2114] %v2219
                  %v2221 = vld [vmem:[%s2123 + $0xc0] sm:%s2114]
                  %2222 = vst [vmem:[%s2124 + $0xc0] sm:%s2114] %v2221
                  %v2223 = vld [vmem:[%s2123 + $0xc4] sm:%s2114]
                  %2224 = vst [vmem:[%s2124 + $0xc4] sm:%s2114] %v2223
                  %v2225 = vld [vmem:[%s2123 + $0xc8] sm:%s2114]
                  %2226 = vst [vmem:[%s2124 + $0xc8] sm:%s2114] %v2225
                  %v2227 = vld [vmem:[%s2123 + $0xcc] sm:%s2114]
                  %2228 = vst [vmem:[%s2124 + $0xcc] sm:%s2114] %v2227
                  %v2229 = vld [vmem:[%s2123 + $0xd0] sm:%s2114]
                  %2230 = vst [vmem:[%s2124 + $0xd0] sm:%s2114] %v2229
                  %v2231 = vld [vmem:[%s2123 + $0xd4] sm:%s2114]
                  %2232 = vst [vmem:[%s2124 + $0xd4] sm:%s2114] %v2231
                  %v2233 = vld [vmem:[%s2123 + $0xd8] sm:%s2114]
                  %2234 = vst [vmem:[%s2124 + $0xd8] sm:%s2114] %v2233
                  %v2235 = vld [vmem:[%s2123 + $0xdc] sm:%s2114]
                  %2236 = vst [vmem:[%s2124 + $0xdc] sm:%s2114] %v2235
                  %v2237 = vld [vmem:[%s2123 + $0xe0] sm:%s2114]
                  %2238 = vst [vmem:[%s2124 + $0xe0] sm:%s2114] %v2237
                  %v2239 = vld [vmem:[%s2123 + $0xe4] sm:%s2114]
                  %2240 = vst [vmem:[%s2124 + $0xe4] sm:%s2114] %v2239
                  %v2241 = vld [vmem:[%s2123 + $0xe8] sm:%s2114]
                  %2242 = vst [vmem:[%s2124 + $0xe8] sm:%s2114] %v2241
                  %v2243 = vld [vmem:[%s2123 + $0xec] sm:%s2114]
                  %2244 = vst [vmem:[%s2124 + $0xec] sm:%s2114] %v2243
                  %v2245 = vld [vmem:[%s2123 + $0xf0] sm:%s2114]
                  %2246 = vst [vmem:[%s2124 + $0xf0] sm:%s2114] %v2245
                  %v2247 = vld [vmem:[%s2123 + $0xf4] sm:%s2114]
                  %2248 = vst [vmem:[%s2124 + $0xf4] sm:%s2114] %v2247
                  %v2249 = vld [vmem:[%s2123 + $0xf8] sm:%s2114]
                  %2250 = vst [vmem:[%s2124 + $0xf8] sm:%s2114] %v2249
                  %v2251 = vld [vmem:[%s2123 + $0xfc] sm:%s2114]
                  %2252 = vst [vmem:[%s2124 + $0xfc] sm:%s2114] %v2251
                  %s2253 = sadd.s32 1, %s2122
                  %p2254 = scmp.ge.s32.totalorder %s2253, %s2115
                  %s2255 = scalar_select %p2254, 0, %s2253
                  %s2256 = smul.u32 %s2255, 256
                  %s2257 = smul.u32 %s2255, 256
                  %s2258 = scalar_lea.vmem %s1920, %s2256 [#allocation2]
                  %s2259 = scalar_lea.vmem %s1931, %s2257
                $region79: #{tpu_custom_call.1} parent=73 // loop_footer
                  %s2119 = sadd.s32 %s2117, 1
                $region80: #{tpu_custom_call.1} parent=73 // loop_footer_branch
                  %2116 = sbr.rel target = $region76
                $region81: #{tpu_custom_call.1} parent=73 // loop_exit
                  _
                %s2260 = sshrl.u32 %s1927, 6
                %s2261 = sand.u32 %s1927, 63
                %s2262 = smul.u32 %s2260, 64
                %s2263 = smul.u32 4, %s2262
                %s2264 = scalar_lea.vmem %s1920, %s2263 [#allocation2]
                %s2265 = smul.u32 4, %s2262
                %s2266 = scalar_lea.vmem %s1931, %s2265
                // While loop
                $region82: #{tpu_custom_call.1} parent=73 // loop_pre_header
                  _
                $region83: #{tpu_custom_call.1} parent=73 // loop_header
                  %s2268 = sphi 0, %s2270
                  %p2269 = scmp.ge.s32.totalorder %s2268, %s2261
                  %s2273 = sphi 0, %s2280
                  %s2274 = sphi %s2264, %s2283
                  %s2275 = sphi %s2266, %s2284
                $region84: #{tpu_custom_call.1} parent=73 // loop_header_branch
                  %2272 = sbr.rel (%p2269) target = $region88
                $region85: #{tpu_custom_call.1} parent=73 // loop_body
                  %v2276 = vld [vmem:[%s2274] sm:%s2114]
                  %2277 = vst [vmem:[%s2275] sm:%s2114] %v2276
                  %s2278 = sadd.s32 1, %s2273
                  %p2279 = scmp.ge.s32.totalorder %s2278, %s2261
                  %s2280 = scalar_select %p2279, 0, %s2278
                  %s2281 = smul.u32 %s2280, 4
                  %s2282 = smul.u32 %s2280, 4
                  %s2283 = scalar_lea.vmem %s2264, %s2281 [#allocation2]
                  %s2284 = scalar_lea.vmem %s2266, %s2282
                $region86: #{tpu_custom_call.1} parent=73 // loop_footer
                  %s2270 = sadd.s32 %s2268, 1
                $region87: #{tpu_custom_call.1} parent=73 // loop_footer_branch
                  %2267 = sbr.rel target = $region83
                $region88: #{tpu_custom_call.1} parent=73 // loop_exit
                  _
              $region74: #{tpu_custom_call.1} parent=51 // pred_fallthru
                _
            $region52: #{tpu_custom_call.1} parent=47 // pred_fallthru
              _
            // Predicated region
            $region53: #{tpu_custom_call.1} parent=47 // pred_check
              _
            $region54: #{tpu_custom_call.1} parent=47 // pred_check_branch
              %1938 = sbr.rel (0) target = $region56
            $region55: #{tpu_custom_call.1} parent=47 // pred_region
              %s1940 = ssub.s32 16, 1
              %s1941 = sshrl.u32 %s1927, 6
              // While loop
              $region57: #{tpu_custom_call.1} parent=55 // loop_pre_header
                _
              $region58: #{tpu_custom_call.1} parent=55 // loop_header
                %s1943 = sphi 0, %s1945
                %p1944 = scmp.ge.s32.totalorder %s1943, %s1941
                %s1948 = sphi 0, %s2081
                %s1949 = sphi %s1920, %s2084
                %s1950 = sphi %s1931, %s2085
              $region59: #{tpu_custom_call.1} parent=55 // loop_header_branch
                %1947 = sbr.rel (%p1944) target = $region63
              $region60: #{tpu_custom_call.1} parent=55 // loop_body
                %v1951 = vld [vmem:[%s1949] sm:%s1940]
                %1952 = vst [vmem:[%s1950] sm:%s1940] %v1951
                %v1953 = vld [vmem:[%s1949 + $0x4] sm:%s1940]
                %1954 = vst [vmem:[%s1950 + $0x4] sm:%s1940] %v1953
                %v1955 = vld [vmem:[%s1949 + $0x8] sm:%s1940]
                %1956 = vst [vmem:[%s1950 + $0x8] sm:%s1940] %v1955
                %v1957 = vld [vmem:[%s1949 + $0xc] sm:%s1940]
                %1958 = vst [vmem:[%s1950 + $0xc] sm:%s1940] %v1957
                %v1959 = vld [vmem:[%s1949 + $0x10] sm:%s1940]
                %1960 = vst [vmem:[%s1950 + $0x10] sm:%s1940] %v1959
                %v1961 = vld [vmem:[%s1949 + $0x14] sm:%s1940]
                %1962 = vst [vmem:[%s1950 + $0x14] sm:%s1940] %v1961
                %v1963 = vld [vmem:[%s1949 + $0x18] sm:%s1940]
                %1964 = vst [vmem:[%s1950 + $0x18] sm:%s1940] %v1963
                %v1965 = vld [vmem:[%s1949 + $0x1c] sm:%s1940]
                %1966 = vst [vmem:[%s1950 + $0x1c] sm:%s1940] %v1965
                %v1967 = vld [vmem:[%s1949 + $0x20] sm:%s1940]
                %1968 = vst [vmem:[%s1950 + $0x20] sm:%s1940] %v1967
                %v1969 = vld [vmem:[%s1949 + $0x24] sm:%s1940]
                %1970 = vst [vmem:[%s1950 + $0x24] sm:%s1940] %v1969
                %v1971 = vld [vmem:[%s1949 + $0x28] sm:%s1940]
                %1972 = vst [vmem:[%s1950 + $0x28] sm:%s1940] %v1971
                %v1973 = vld [vmem:[%s1949 + $0x2c] sm:%s1940]
                %1974 = vst [vmem:[%s1950 + $0x2c] sm:%s1940] %v1973
                %v1975 = vld [vmem:[%s1949 + $0x30] sm:%s1940]
                %1976 = vst [vmem:[%s1950 + $0x30] sm:%s1940] %v1975
                %v1977 = vld [vmem:[%s1949 + $0x34] sm:%s1940]
                %1978 = vst [vmem:[%s1950 + $0x34] sm:%s1940] %v1977
                %v1979 = vld [vmem:[%s1949 + $0x38] sm:%s1940]
                %1980 = vst [vmem:[%s1950 + $0x38] sm:%s1940] %v1979
                %v1981 = vld [vmem:[%s1949 + $0x3c] sm:%s1940]
                %1982 = vst [vmem:[%s1950 + $0x3c] sm:%s1940] %v1981
                %v1983 = vld [vmem:[%s1949 + $0x40] sm:%s1940]
                %1984 = vst [vmem:[%s1950 + $0x40] sm:%s1940] %v1983
                %v1985 = vld [vmem:[%s1949 + $0x44] sm:%s1940]
                %1986 = vst [vmem:[%s1950 + $0x44] sm:%s1940] %v1985
                %v1987 = vld [vmem:[%s1949 + $0x48] sm:%s1940]
                %1988 = vst [vmem:[%s1950 + $0x48] sm:%s1940] %v1987
                %v1989 = vld [vmem:[%s1949 + $0x4c] sm:%s1940]
                %1990 = vst [vmem:[%s1950 + $0x4c] sm:%s1940] %v1989
                %v1991 = vld [vmem:[%s1949 + $0x50] sm:%s1940]
                %1992 = vst [vmem:[%s1950 + $0x50] sm:%s1940] %v1991
                %v1993 = vld [vmem:[%s1949 + $0x54] sm:%s1940]
                %1994 = vst [vmem:[%s1950 + $0x54] sm:%s1940] %v1993
                %v1995 = vld [vmem:[%s1949 + $0x58] sm:%s1940]
                %1996 = vst [vmem:[%s1950 + $0x58] sm:%s1940] %v1995
                %v1997 = vld [vmem:[%s1949 + $0x5c] sm:%s1940]
                %1998 = vst [vmem:[%s1950 + $0x5c] sm:%s1940] %v1997
                %v1999 = vld [vmem:[%s1949 + $0x60] sm:%s1940]
                %2000 = vst [vmem:[%s1950 + $0x60] sm:%s1940] %v1999
                %v2001 = vld [vmem:[%s1949 + $0x64] sm:%s1940]
                %2002 = vst [vmem:[%s1950 + $0x64] sm:%s1940] %v2001
                %v2003 = vld [vmem:[%s1949 + $0x68] sm:%s1940]
                %2004 = vst [vmem:[%s1950 + $0x68] sm:%s1940] %v2003
                %v2005 = vld [vmem:[%s1949 + $0x6c] sm:%s1940]
                %2006 = vst [vmem:[%s1950 + $0x6c] sm:%s1940] %v2005
                %v2007 = vld [vmem:[%s1949 + $0x70] sm:%s1940]
                %2008 = vst [vmem:[%s1950 + $0x70] sm:%s1940] %v2007
                %v2009 = vld [vmem:[%s1949 + $0x74] sm:%s1940]
                %2010 = vst [vmem:[%s1950 + $0x74] sm:%s1940] %v2009
                %v2011 = vld [vmem:[%s1949 + $0x78] sm:%s1940]
                %2012 = vst [vmem:[%s1950 + $0x78] sm:%s1940] %v2011
                %v2013 = vld [vmem:[%s1949 + $0x7c] sm:%s1940]
                %2014 = vst [vmem:[%s1950 + $0x7c] sm:%s1940] %v2013
                %v2015 = vld [vmem:[%s1949 + $0x80] sm:%s1940]
                %2016 = vst [vmem:[%s1950 + $0x80] sm:%s1940] %v2015
                %v2017 = vld [vmem:[%s1949 + $0x84] sm:%s1940]
                %2018 = vst [vmem:[%s1950 + $0x84] sm:%s1940] %v2017
                %v2019 = vld [vmem:[%s1949 + $0x88] sm:%s1940]
                %2020 = vst [vmem:[%s1950 + $0x88] sm:%s1940] %v2019
                %v2021 = vld [vmem:[%s1949 + $0x8c] sm:%s1940]
                %2022 = vst [vmem:[%s1950 + $0x8c] sm:%s1940] %v2021
                %v2023 = vld [vmem:[%s1949 + $0x90] sm:%s1940]
                %2024 = vst [vmem:[%s1950 + $0x90] sm:%s1940] %v2023
                %v2025 = vld [vmem:[%s1949 + $0x94] sm:%s1940]
                %2026 = vst [vmem:[%s1950 + $0x94] sm:%s1940] %v2025
                %v2027 = vld [vmem:[%s1949 + $0x98] sm:%s1940]
                %2028 = vst [vmem:[%s1950 + $0x98] sm:%s1940] %v2027
                %v2029 = vld [vmem:[%s1949 + $0x9c] sm:%s1940]
                %2030 = vst [vmem:[%s1950 + $0x9c] sm:%s1940] %v2029
                %v2031 = vld [vmem:[%s1949 + $0xa0] sm:%s1940]
                %2032 = vst [vmem:[%s1950 + $0xa0] sm:%s1940] %v2031
                %v2033 = vld [vmem:[%s1949 + $0xa4] sm:%s1940]
                %2034 = vst [vmem:[%s1950 + $0xa4] sm:%s1940] %v2033
                %v2035 = vld [vmem:[%s1949 + $0xa8] sm:%s1940]
                %2036 = vst [vmem:[%s1950 + $0xa8] sm:%s1940] %v2035
                %v2037 = vld [vmem:[%s1949 + $0xac] sm:%s1940]
                %2038 = vst [vmem:[%s1950 + $0xac] sm:%s1940] %v2037
                %v2039 = vld [vmem:[%s1949 + $0xb0] sm:%s1940]
                %2040 = vst [vmem:[%s1950 + $0xb0] sm:%s1940] %v2039
                %v2041 = vld [vmem:[%s1949 + $0xb4] sm:%s1940]
                %2042 = vst [vmem:[%s1950 + $0xb4] sm:%s1940] %v2041
                %v2043 = vld [vmem:[%s1949 + $0xb8] sm:%s1940]
                %2044 = vst [vmem:[%s1950 + $0xb8] sm:%s1940] %v2043
                %v2045 = vld [vmem:[%s1949 + $0xbc] sm:%s1940]
                %2046 = vst [vmem:[%s1950 + $0xbc] sm:%s1940] %v2045
                %v2047 = vld [vmem:[%s1949 + $0xc0] sm:%s1940]
                %2048 = vst [vmem:[%s1950 + $0xc0] sm:%s1940] %v2047
                %v2049 = vld [vmem:[%s1949 + $0xc4] sm:%s1940]
                %2050 = vst [vmem:[%s1950 + $0xc4] sm:%s1940] %v2049
                %v2051 = vld [vmem:[%s1949 + $0xc8] sm:%s1940]
                %2052 = vst [vmem:[%s1950 + $0xc8] sm:%s1940] %v2051
                %v2053 = vld [vmem:[%s1949 + $0xcc] sm:%s1940]
                %2054 = vst [vmem:[%s1950 + $0xcc] sm:%s1940] %v2053
                %v2055 = vld [vmem:[%s1949 + $0xd0] sm:%s1940]
                %2056 = vst [vmem:[%s1950 + $0xd0] sm:%s1940] %v2055
                %v2057 = vld [vmem:[%s1949 + $0xd4] sm:%s1940]
                %2058 = vst [vmem:[%s1950 + $0xd4] sm:%s1940] %v2057
                %v2059 = vld [vmem:[%s1949 + $0xd8] sm:%s1940]
                %2060 = vst [vmem:[%s1950 + $0xd8] sm:%s1940] %v2059
                %v2061 = vld [vmem:[%s1949 + $0xdc] sm:%s1940]
                %2062 = vst [vmem:[%s1950 + $0xdc] sm:%s1940] %v2061
                %v2063 = vld [vmem:[%s1949 + $0xe0] sm:%s1940]
                %2064 = vst [vmem:[%s1950 + $0xe0] sm:%s1940] %v2063
                %v2065 = vld [vmem:[%s1949 + $0xe4] sm:%s1940]
                %2066 = vst [vmem:[%s1950 + $0xe4] sm:%s1940] %v2065
                %v2067 = vld [vmem:[%s1949 + $0xe8] sm:%s1940]
                %2068 = vst [vmem:[%s1950 + $0xe8] sm:%s1940] %v2067
                %v2069 = vld [vmem:[%s1949 + $0xec] sm:%s1940]
                %2070 = vst [vmem:[%s1950 + $0xec] sm:%s1940] %v2069
                %v2071 = vld [vmem:[%s1949 + $0xf0] sm:%s1940]
                %2072 = vst [vmem:[%s1950 + $0xf0] sm:%s1940] %v2071
                %v2073 = vld [vmem:[%s1949 + $0xf4] sm:%s1940]
                %2074 = vst [vmem:[%s1950 + $0xf4] sm:%s1940] %v2073
                %v2075 = vld [vmem:[%s1949 + $0xf8] sm:%s1940]
                %2076 = vst [vmem:[%s1950 + $0xf8] sm:%s1940] %v2075
                %v2077 = vld [vmem:[%s1949 + $0xfc] sm:%s1940]
                %2078 = vst [vmem:[%s1950 + $0xfc] sm:%s1940] %v2077
                %s2079 = sadd.s32 1, %s1948
                %p2080 = scmp.ge.s32.totalorder %s2079, %s1941
                %s2081 = scalar_select %p2080, 0, %s2079
                %s2082 = smul.u32 %s2081, 256
                %s2083 = smul.u32 %s2081, 256
                %s2084 = scalar_lea.vmem %s1920, %s2082 [#allocation2]
                %s2085 = scalar_lea.vmem %s1931, %s2083
              $region61: #{tpu_custom_call.1} parent=55 // loop_footer
                %s1945 = sadd.s32 %s1943, 1
              $region62: #{tpu_custom_call.1} parent=55 // loop_footer_branch
                %1942 = sbr.rel target = $region58
              $region63: #{tpu_custom_call.1} parent=55 // loop_exit
                _
              %s2086 = sshrl.u32 %s1927, 6
              %s2087 = sand.u32 %s1927, 63
              %s2088 = smul.u32 %s2086, 64
              %s2089 = smul.u32 4, %s2088
              %s2090 = scalar_lea.vmem %s1920, %s2089 [#allocation2]
              %s2091 = smul.u32 4, %s2088
              %s2092 = scalar_lea.vmem %s1931, %s2091
              // While loop
              $region64: #{tpu_custom_call.1} parent=55 // loop_pre_header
                _
              $region65: #{tpu_custom_call.1} parent=55 // loop_header
                %s2094 = sphi 0, %s2096
                %p2095 = scmp.ge.s32.totalorder %s2094, %s2087
                %s2099 = sphi 0, %s2106
                %s2100 = sphi %s2090, %s2109
                %s2101 = sphi %s2092, %s2110
              $region66: #{tpu_custom_call.1} parent=55 // loop_header_branch
                %2098 = sbr.rel (%p2095) target = $region70
              $region67: #{tpu_custom_call.1} parent=55 // loop_body
                %v2102 = vld [vmem:[%s2100] sm:%s1940]
                %2103 = vst [vmem:[%s2101] sm:%s1940] %v2102
                %s2104 = sadd.s32 1, %s2099
                %p2105 = scmp.ge.s32.totalorder %s2104, %s2087
                %s2106 = scalar_select %p2105, 0, %s2104
                %s2107 = smul.u32 %s2106, 4
                %s2108 = smul.u32 %s2106, 4
                %s2109 = scalar_lea.vmem %s2090, %s2107 [#allocation2]
                %s2110 = scalar_lea.vmem %s2092, %s2108
              $region68: #{tpu_custom_call.1} parent=55 // loop_footer
                %s2096 = sadd.s32 %s2094, 1
              $region69: #{tpu_custom_call.1} parent=55 // loop_footer_branch
                %2093 = sbr.rel target = $region65
              $region70: #{tpu_custom_call.1} parent=55 // loop_exit
                _
            $region56: #{tpu_custom_call.1} parent=47 // pred_fallthru
              _
          $region48: #{tpu_custom_call.1} parent=43 // pred_fallthru
            _
          %2285 = vnop
        $region44: #{tpu_custom_call.1} parent=39 // pred_fallthru
          _
      $region40: #{tpu_custom_call.1} parent=5 // pred_fallthru
        _
      %p2286 = scmp.le.s32.totalorder 2, %s11
      // Predicated region
      $region89: #{tpu_custom_call.1} parent=5 // pred_check
        %p2287 = pneg %p2286
      $region90: #{tpu_custom_call.1} parent=5 // pred_check_branch
        %2289 = sbr.rel (%p2287) target = $region92
      $region91: #{tpu_custom_call.1} parent=5 // pred_region
        %s2290 = ssub.s32 %s11, 2
        // Predicated region
        $region93: #{tpu_custom_call.1} parent=91 // pred_check
          %p2291 = pneg %p155
        $region94: #{tpu_custom_call.1} parent=91 // pred_check_branch
          %2293 = sbr.rel (%p2291) target = $region96
        $region95: #{tpu_custom_call.1} parent=91 // pred_region
          %s2294 = sand.u32 %s140, 1
          %s2295 = sand.u32 %s140, 1
          %s2296 = smul.addr %s2295, 256
          %s2297 = scalar_lea.vmem [#allocation2], %s2296
        $region96: #{tpu_custom_call.1} parent=91 // pred_fallthru
          _
      $region92: #{tpu_custom_call.1} parent=5 // pred_fallthru
        _
    $region6: #{tpu_custom_call.1} parent=1 // loop_footer
      %s15 = sadd.s32 1, %s11
    $region7: #{tpu_custom_call.1} parent=1 // loop_footer_branch
      %10 = sbr.rel target = $region3
    $region8: #{tpu_custom_call.1} parent=1 // loop_exit
      _

</llo_original>
